<compile_context>
chip_gen: v7x
topology: tpu7x:2x2x1
jax: 0.10.0
libtpu: 0.0.40
codegen_flags: <defaults>
</compile_context>

<pallas_src>
import functools

import numpy as np
import jax
import jax.numpy as jnp
from jax.experimental import pallas as pl
from jax.experimental.pallas import tpu as pltpu


# ----------------------------------------------------------------------------
# Fused forward kernel: encoder -> folded SplineConv -> decoder, one launch.
# ----------------------------------------------------------------------------
def _fused_fwd_kernel(y_ref, enc_ref, spl_ref, dec_ref, o_ref):
    # y_ref   : (1, nT*L)        one batch element, flattened (torso node, time)
    # enc_ref : (nT*L, nT*F*S)   I_T (x) enc_w          (encoder, all torso nodes)
    # spl_ref : (nT*F*S, H*F*S)  (sum_k M_k (x) W_k) (x) I_S   (SplineConv fold)
    # dec_ref : (H*F*S, H*L)     I_H (x) dec_w          (decoder, all heart nodes)
    # o_ref   : (1, H*L)
    z = jnp.dot(y_ref[...], enc_ref[...], preferred_element_type=jnp.float32)
    # TODO(synk): EncoderTorso / Decoder class definitions were not provided;
    # they are linear per-node stand-ins.  If the real modules are nonlinear,
    # apply the nonlinearities to `z` / `h` right here between the matmuls
    # (the per-stage Kronecker folds stay valid; only whole-chain folding
    # would become invalid).
    h = jnp.dot(z, spl_ref[...], preferred_element_type=jnp.float32)
    x = jnp.dot(h, dec_ref[...], preferred_element_type=jnp.float32)
    o_ref[...] = x.astype(o_ref.dtype)


@jax.jit
def _fused_forward(y, enc_op, spl_op, dec_op):
    """y: (B, nT, L) -> (B, H, L) via one fused pallas_call."""
    B, nT, L = y.shape
    TL = nT * L
    TFS = enc_op.shape[1]
    HFS, HL = dec_op.shape
    H = HL // L

    # Contiguous (free) reshape only; all permute plumbing lives inside the
    # folded operators, never inside the kernel.
    y2 = y.reshape(B, 1, TL)

    flops = 2 * B * (TL * TFS + TFS * HFS + HFS * HL)
    bytes_accessed = 4 * (B * TL + TL * TFS + TFS * HFS + HFS * HL + B * HL)

    out = pl.pallas_call(
        _fused_fwd_kernel,
        out_shape=jax.ShapeDtypeStruct((B, 1, HL), jnp.float32),
        grid_spec=pltpu.PrefetchScalarGridSpec(
            num_scalar_prefetch=0,
            grid=(B,),
            in_specs=[
                # per-batch activation block; last two dims == full array dims
                pl.BlockSpec((None, 1, TL), lambda b: (b, 0, 0)),
                # static operators: grid-invariant index maps -> DMA'd once
                pl.BlockSpec(enc_op.shape, lambda b: (0, 0)),
                pl.BlockSpec(spl_op.shape, lambda b: (0, 0)),
                pl.BlockSpec(dec_op.shape, lambda b: (0, 0)),
            ],
            out_specs=pl.BlockSpec((None, 1, HL), lambda b: (b, 0, 0)),
        ),
        compiler_params=pltpu.CompilerParams(
            # Batch axis is parallel -> shards across v7x's two TensorCores.
            dimension_semantics=("parallel",),
            # ~2.3 MiB of operators (x2 pipeline buffers): 32 MiB is safe on
            # v5e/v6e (128 MiB VMEM) and on v7x (64 MiB VMEM).
            vmem_limit_bytes=32 * 1024 * 1024,
        ),
        cost_estimate=pl.CostEstimate(flops=flops, transcendentals=0,
                                      bytes_accessed=bytes_accessed),
    )(y2, enc_op, spl_op, dec_op)
    return out.reshape(B, H, L)


# ----------------------------------------------------------------------------
# Setup-time glue: dense B-spline adjacency + Kronecker folds of the pipeline.
# ----------------------------------------------------------------------------
def build_spline_adjacency(edge_src, edge_dst, edge_attr, num_heart, num_torso,
                           kernel_size=3):
    """Dense per-spline-kernel adjacency M[k, heart, torso] for an open
    quadratic B-spline basis (kernel_size=3, dim=3, norm=False,
    root_weight=False, bias=False  ->  pure basis-weighted scatter-add)."""
    u = np.asarray(edge_attr, dtype=np.float64)                    # (E, 3)
    b = np.stack([0.5 * (1.0 - u) ** 2,
                  -u ** 2 + u + 0.5,
                  0.5 * u ** 2], axis=-1)                          # (E, 3, 3)
    K = kernel_size ** u.shape[1]
    M = np.zeros((K, num_heart, num_torso), dtype=np.float64)
    for i0 in range(kernel_size):
        for i1 in range(kernel_size):
            for i2 in range(kernel_size):
                k = i0 + i1 * kernel_size + i2 * kernel_size * kernel_size
                coeff = b[:, 0, i0] * b[:, 1, i1] * b[:, 2, i2]
                np.add.at(M[k], (edge_dst, edge_src), coeff)       # scatter-add
    return M                                                        # np.float64


def fold_pipeline_operators(M, enc_w, spline_w, dec_w, latent_f_dim,
                            latent_s_dim):
    """Fold the K=27 spline kernels AND all static layout permutes into three
    dense operators so the runtime forward is three chained 2-D matmuls with
    no in-kernel transposes/reshapes (exact: graph + weights are static):

        EncOp[(t,l),   (t',f,s)]  = d(t,t') * enc_w[l, f*S+s]
        SplOp[(t,f,s), (h,g,s')]  = d(s,s') * sum_k M[k,h,t] * W[k,f,g]
        DecOp[(h,g,s), (h',l)]    = d(h,h') * dec_w[g*S+s, l]

    # TODO(synk): for production-size graphs the dense fold grows as
    # O(T*H*F^2*S^2); switch to a scalar-prefetch gather kernel over the
    # 3-sparse bipartite graph instead of a dense operator.
    """
    Kk, H, T = M.shape
    F = latent_f_dim
    S = latent_s_dim
    enc64 = np.asarray(enc_w, dtype=np.float64)            # (L, F*S), cols (f,s)
    dec64 = np.asarray(dec_w, dtype=np.float64)            # (F*S, L), rows (g,s)
    w64 = np.asarray(spline_w, dtype=np.float64)           # (K, F, G)
    MW = np.einsum('kht,kfg->tfhg', np.asarray(M, np.float64), w64)
    MW = MW.reshape(T * F, H * F)                          # (T*F, H*G)
    enc_op = np.kron(np.eye(T), enc64)                     # (T*L,   T*F*S)
    spl_op = np.kron(MW, np.eye(S))                        # (T*F*S, H*F*S)
    dec_op = np.kron(np.eye(H), dec64)                     # (H*F*S, H*L)
    return (jnp.asarray(enc_op, dtype=jnp.float32),
            jnp.asarray(spl_op, dtype=jnp.float32),
            jnp.asarray(dec_op, dtype=jnp.float32))


# ----------------------------------------------------------------------------
# Model
# ----------------------------------------------------------------------------
class STGCNNTorsoHeartPallas:
    def __init__(self, num_filters, len_seq, latent_f_dim, latent_s_dim, key):
        self.num_filters = num_filters
        self.len_seq = len_seq
        self.latent_f_dim = latent_f_dim
        self.latent_s_dim = latent_s_dim
        k1, k2, k3 = jax.random.split(key, 3)
        fs = latent_f_dim * latent_s_dim
        # TODO(synk): EncoderTorso / Decoder class definitions were not
        # provided; stand-ins are per-node linear projections
        # len_seq -> latent_f_dim*latent_s_dim and back.
        self.enc_w = 0.1 * jax.random.normal(k1, (len_seq, fs), dtype=jnp.float32)
        self.dec_w = 0.1 * jax.random.normal(k2, (fs, len_seq), dtype=jnp.float32)
        self.spline_w = 0.1 * jax.random.normal(
            k3, (27, latent_f_dim, latent_f_dim), dtype=jnp.float32)
        self.M = {}          # dense per-spline-kernel adjacency (K, H, T) (reference)
        self.enc_op = {}     # I_T (x) enc_w
        self.spl_op = {}     # (sum_k M_k (x) W_k) (x) I_S
        self.dec_op = {}     # I_H (x) dec_w
        self.num_heart = {}
        self.num_torso = {}

    def setup(self, heart_name, num_heart, num_torso, key):
        # Synthetic H_inv bipartite graph: torso node (source) -> heart node
        # (target), 3 torso neighbours per heart node, 3-D pseudo coords in [0,1).
        src, dst = [], []
        for i in range(num_heart):
            for r in range(3):
                src.append((i * 3 + r) % num_torso)
                dst.append(i)
        src = np.asarray(src)
        dst = np.asarray(dst)
        u = np.asarray(jax.random.uniform(key, (len(src), 3),
                                          minval=0.0, maxval=0.999))
        M = build_spline_adjacency(src, dst, u, num_heart, num_torso)
        enc_op, spl_op, dec_op = fold_pipeline_operators(
            M, self.enc_w, self.spline_w, self.dec_w,
            self.latent_f_dim, self.latent_s_dim)
        self.M[heart_name] = jnp.asarray(M, dtype=jnp.float32)
        self.enc_op[heart_name] = enc_op
        self.spl_op[heart_name] = spl_op
        self.dec_op[heart_name] = dec_op
        self.num_heart[heart_name] = num_heart
        self.num_torso[heart_name] = num_torso

    def forward(self, y, heart_name):
        x = _fused_forward(y, self.enc_op[heart_name],
                           self.spl_op[heart_name], self.dec_op[heart_name])
        return ((x, None), None)


if __name__ == "__main__":
    key = jax.random.PRNGKey(0)
    kp, kg, ky = jax.random.split(key, 3)

    num_filters = [8, 16]
    len_seq, latent_f_dim, latent_s_dim = 8, 8, 4
    B, num_heart, num_torso = 2, 24, 16

    model = STGCNNTorsoHeartPallas(num_filters, len_seq, latent_f_dim,
                                   latent_s_dim, kp)
    model.setup("heart0", num_heart, num_torso, kg)

    y = jax.random.normal(ky, (B, num_torso, len_seq), dtype=jnp.float32)

    (x, _), _ = model.forward(y, "heart0")
    x = jax.block_until_ready(x)
    assert x.shape == (B, num_heart, len_seq)

    # Pure-JAX reference of the whole forward using the ORIGINAL per-spline-
    # kernel structure (sum_k M_k @ x_s @ W_k) with the explicit permutes --
    # validates the Kronecker-folded operators, the fused kernel and all
    # layout plumbing.
    F, S = latent_f_dim, latent_s_dim
    z_ref = (y.reshape(B * num_torso, len_seq) @ model.enc_w)
    z_ref = z_ref.reshape(B, num_torso, F, S)
    xt = jnp.transpose(z_ref, (0, 3, 1, 2)).reshape(B * S, num_torso, F)
    o_ref = jnp.einsum('kht,ntf,kfg->nhg',
                       model.M["heart0"], xt, model.spline_w)
    z_h_ref = jnp.transpose(o_ref.reshape(B, S, num_heart, F), (0, 2, 3, 1))
    x_ref = (z_h_ref.reshape(B * num_heart, F * S) @ model.dec_w)
    x_ref = x_ref.reshape(B, num_heart, len_seq)
    np.testing.assert_allclose(np.asarray(x), np.asarray(x_ref),
                               rtol=2e-3, atol=2e-3)

    print("KERNEL_OK")
</pallas_src>

<mosaic_0001>
module attributes {stable_mosaic.version = 11 : i64} {
  func.func @_fused_fwd_kernel(%arg0: i32, %arg1: memref<1x1x128xf32, #tpu.memory_space<vmem>>, %arg2: memref<128x512xf32, #tpu.memory_space<vmem>>, %arg3: memref<512x768xf32, #tpu.memory_space<vmem>>, %arg4: memref<768x192xf32, #tpu.memory_space<vmem>>, %arg5: memref<1x1x192xf32, #tpu.memory_space<vmem>>) attributes {dimension_semantics = [#tpu.dimension_semantics<parallel>], iteration_bounds = array<i64: 2>, scalar_prefetch = 0 : i64, scratch_operands = 0 : i64, tpu.core_type = #tpu.core_type<tc>, window_params = [{transform_indices = @transform_0, window_bounds = array<i64: 1, 1, 128>}, {pipeline_mode = #tpu.pipeline_mode<synchronous>, transform_indices = @transform_1, window_bounds = array<i64: 128, 512>}, {pipeline_mode = #tpu.pipeline_mode<synchronous>, transform_indices = @transform_2, window_bounds = array<i64: 512, 768>}, {pipeline_mode = #tpu.pipeline_mode<synchronous>, transform_indices = @transform_3, window_bounds = array<i64: 768, 192>}, {transform_indices = @transform_4, window_bounds = array<i64: 1, 1, 192>}]} {
    %c0 = arith.constant 0 : index
    %c0_0 = arith.constant 0 : index
    %c0_1 = arith.constant 0 : index
    %0 = vector.load %arg1[%c0, %c0_0, %c0_1] : memref<1x1x128xf32, #tpu.memory_space<vmem>>, vector<1x1x128xf32>
    %1 = vector.shape_cast %0 : vector<1x1x128xf32> to vector<1x128xf32>
    %c0_2 = arith.constant 0 : index
    %c0_3 = arith.constant 0 : index
    %2 = vector.load %arg2[%c0_2, %c0_3] : memref<128x512xf32, #tpu.memory_space<vmem>>, vector<128x512xf32>
    %cst = arith.constant dense<0.000000e+00> : vector<1x512xf32>
    %3 = tpu.matmul %1, %2, %cst {dimension_numbers = #tpu.dot_dimension_numbers<[1], [0], [0], [1], [0, 0, 1, 1], [], []>} : vector<1x128xf32>, vector<128x512xf32>, vector<1x512xf32> -> vector<1x512xf32>
    %c0_4 = arith.constant 0 : index
    %c0_5 = arith.constant 0 : index
    %4 = vector.load %arg3[%c0_4, %c0_5] : memref<512x768xf32, #tpu.memory_space<vmem>>, vector<512x768xf32>
    %cst_6 = arith.constant dense<0.000000e+00> : vector<1x768xf32>
    %5 = tpu.matmul %3, %4, %cst_6 {dimension_numbers = #tpu.dot_dimension_numbers<[1], [0], [0], [1], [0, 0, 1, 1], [], []>} : vector<1x512xf32>, vector<512x768xf32>, vector<1x768xf32> -> vector<1x768xf32>
    %c0_7 = arith.constant 0 : index
    %c0_8 = arith.constant 0 : index
    %6 = vector.load %arg4[%c0_7, %c0_8] : memref<768x192xf32, #tpu.memory_space<vmem>>, vector<768x192xf32>
    %cst_9 = arith.constant dense<0.000000e+00> : vector<1x192xf32>
    %7 = tpu.matmul %5, %6, %cst_9 {dimension_numbers = #tpu.dot_dimension_numbers<[1], [0], [0], [1], [0, 0, 1, 1], [], []>} : vector<1x768xf32>, vector<768x192xf32>, vector<1x192xf32> -> vector<1x192xf32>
    %c0_10 = arith.constant 0 : index
    %c0_11 = arith.constant 0 : index
    %c0_12 = arith.constant 0 : index
    %8 = vector.load %arg5[%c0_10, %c0_11, %c0_12] : memref<1x1x192xf32, #tpu.memory_space<vmem>>, vector<1x1x192xf32>
    %9 = vector.shape_cast %8 : vector<1x1x192xf32> to vector<1x192xf32>
    %10 = vector.shape_cast %7 : vector<1x192xf32> to vector<1x1x192xf32>
    tpu.vector_store %arg5[%c0_10, %c0_11, %c0_12], %10 {strides = array<i32>} : memref<1x1x192xf32, #tpu.memory_space<vmem>>, vector<1x1x192xf32>,
    return
  }
  func.func @transform_0(%arg0: i32) -> (i32, i32, i32) {
    %c0_i32 = arith.constant 0 : i32
    %c0_i32_0 = arith.constant 0 : i32
    %c0_i32_1 = arith.constant 0 : i32
    return %arg0, %c0_i32, %c0_i32_0 : i32, i32, i32
  }
  func.func @transform_1(%arg0: i32) -> (i32, i32) {
    %c0_i32 = arith.constant 0 : i32
    %c0_i32_0 = arith.constant 0 : i32
    %c0_i32_1 = arith.constant 0 : i32
    return %c0_i32, %c0_i32_0 : i32, i32
  }
  func.func @transform_2(%arg0: i32) -> (i32, i32) {
    %c0_i32 = arith.constant 0 : i32
    %c0_i32_0 = arith.constant 0 : i32
    %c0_i32_1 = arith.constant 0 : i32
    return %c0_i32, %c0_i32_0 : i32, i32
  }
  func.func @transform_3(%arg0: i32) -> (i32, i32) {
    %c0_i32 = arith.constant 0 : i32
    %c0_i32_0 = arith.constant 0 : i32
    %c0_i32_1 = arith.constant 0 : i32
    return %c0_i32, %c0_i32_0 : i32, i32
  }
  func.func @transform_4(%arg0: i32) -> (i32, i32, i32) {
    %c0_i32 = arith.constant 0 : i32
    %c0_i32_0 = arith.constant 0 : i32
    %c0_i32_1 = arith.constant 0 : i32
    return %arg0, %c0_i32, %c0_i32_0 : i32, i32, i32
  }
}

</mosaic_0001>

<llo_original>
// kernel: _fused_forward.1
$region0: #{_fused_forward.1}
  #allocation0 [shape = 'u32[]', space=smem, size = 0x4, offset = 0x4, fixed_abs, tag = 'smem constant byte address 0x4 - core index']
  #allocation1 [shape = 'u32[144,128]{1,0:T(1,128)}', space=vmem, size = 0x12000, scoped, tag = 'internal scratch']
  %s0 = inlined_call_operand.vmem [shape: f32[2,1,128], index: 0, kind: input, shape index: {}]
  %s1 = inlined_call_operand.vmem [shape: f32[128,512], index: 1, kind: input, shape index: {}]
  %s2 = inlined_call_operand.hbm [shape: f32[512,768], index: 2, kind: input, shape index: {}]
  %s3 = inlined_call_operand.vmem [shape: f32[768,192], index: 3, kind: input, shape index: {}]
  %s4 = inlined_call_operand.vmem [shape: f32[2,1,192], index: 4, kind: output, shape index: {}]
  %s5 = sld [smem:[#allocation0]]
  $region53: #{_fused_forward.1} parent=0
    _
  %s7 = ssub.s32 1, %s5
  %s8 = scalar_select 0, %s7, %s5
  $region1: #{_fused_forward.1} parent=0
    #allocation2 [shape = 'u8[1572864]{0}', space=vmem, size = 0x180000, scoped, tag = 'input window, operand 2, single buffered']
    #allocation3 [shape = 's32[2]{0}', space=sflag, size = 0x8, scoped, tag = 'scoped memory for _fused_forward.1']
    %9 = vsyncpa [#allocation3], 0
    loop: start=0, step=1, limit=4
    $region2: #{_fused_forward.1} parent=1 // loop_pre_header
      _
    $region3: #{_fused_forward.1} parent=1 // loop_header
      %s11 = sphi 0, %s15
      %p12 = scmp.ge.s32.totalorder %s11, 4
      %s21 = sphi 0, %s23
      %s24 = sphi 0, %s21
      %s25 = sphi 0, %s24
      %s41 = sphi 0, %s25
      %s45 = sphi 0, %s45
      %s47 = sphi 0, %s45
      %s48 = sphi 0, %s47
      %s62 = sphi 0, %s48
      %s66 = sphi 0, %s66
      %s68 = sphi 0, %s66
      %s69 = sphi 0, %s68
      %s83 = sphi 0, %s69
      %s87 = sphi 0, %s87
      %s89 = sphi 0, %s87
      %s90 = sphi 0, %s89
      %s104 = sphi 0, %s90
      %s110 = sphi 0, %s112
      %s113 = sphi 0, %s110
      %s114 = sphi 0, %s113
      %s130 = sphi 0, %s114
    $region4: #{_fused_forward.1} parent=1 // loop_header_branch
      %14 = sbr.rel (%p12) target = $region8
    $region5: #{_fused_forward.1} parent=1 // loop_body
      %s16 = ssub.s32 %s11, 1
      %s17 = ssub.s32 %s11, 2
      %s18 = sadd.s32 %s11, 1
      %s19 = ssub.s32 %s11, %s18
      %p20 = scmp.eq.s32.totalorder %s19, 0
      %s22 = sadd.s32 %s21, 1
      %s23 = scalar_select %p20, %s21, %s22
      %p26 = pneg %p20
      %p27 = scmp.eq.s32.totalorder %s11, 1
      %p28 = por %p26, %p27
      %p29 = scmp.ne.s32.totalorder %s21, %s24
      %p30 = scmp.eq.s32.totalorder %s11, 0
      %p31 = por %p29, %p30
      %p32 = scmp.ne.s32.totalorder %s21, %s24
      %p33 = scmp.eq.s32.totalorder %s16, 1
      %p34 = por %p32, %p33
      %p35 = scmp.ne.s32.totalorder %s24, %s25
      %p36 = scmp.eq.s32.totalorder %s16, 0
      %p37 = por %p35, %p36
      %p38 = scmp.ne.s32.totalorder %s24, %s25
      %p39 = scmp.eq.s32.totalorder %s17, 1
      %p40 = por %p38, %p39
      %p42 = scmp.ne.s32.totalorder %s25, %s41
      %p43 = scmp.eq.s32.totalorder %s17, 0
      %p44 = por %p42, %p43
      %s46 = sadd.s32 %s45, 1
      %p49 = scmp.eq.s32.totalorder %s11, 1
      %p50 = scmp.ne.s32.totalorder %s45, %s47
      %p51 = scmp.eq.s32.totalorder %s11, 0
      %p52 = por %p50, %p51
      %p53 = scmp.ne.s32.totalorder %s45, %s47
      %p54 = scmp.eq.s32.totalorder %s16, 1
      %p55 = por %p53, %p54
      %p56 = scmp.ne.s32.totalorder %s47, %s48
      %p57 = scmp.eq.s32.totalorder %s16, 0
      %p58 = por %p56, %p57
      %p59 = scmp.ne.s32.totalorder %s47, %s48
      %p60 = scmp.eq.s32.totalorder %s17, 1
      %p61 = por %p59, %p60
      %p63 = scmp.ne.s32.totalorder %s48, %s62
      %p64 = scmp.eq.s32.totalorder %s17, 0
      %p65 = por %p63, %p64
      %s67 = sadd.s32 %s66, 1
      %p70 = scmp.eq.s32.totalorder %s11, 1
      %p71 = scmp.ne.s32.totalorder %s66, %s68
      %p72 = scmp.eq.s32.totalorder %s11, 0
      %p73 = por %p71, %p72
      %p74 = scmp.ne.s32.totalorder %s66, %s68
      %p75 = scmp.eq.s32.totalorder %s16, 1
      %p76 = por %p74, %p75
      %p77 = scmp.ne.s32.totalorder %s68, %s69
      %p78 = scmp.eq.s32.totalorder %s16, 0
      %p79 = por %p77, %p78
      %p80 = scmp.ne.s32.totalorder %s68, %s69
      %p81 = scmp.eq.s32.totalorder %s17, 1
      %p82 = por %p80, %p81
      %p84 = scmp.ne.s32.totalorder %s69, %s83
      %p85 = scmp.eq.s32.totalorder %s17, 0
      %p86 = por %p84, %p85
      %s88 = sadd.s32 %s87, 1
      %p91 = scmp.eq.s32.totalorder %s11, 1
      %p92 = scmp.ne.s32.totalorder %s87, %s89
      %p93 = scmp.eq.s32.totalorder %s11, 0
      %p94 = por %p92, %p93
      %p95 = scmp.ne.s32.totalorder %s87, %s89
      %p96 = scmp.eq.s32.totalorder %s16, 1
      %p97 = por %p95, %p96
      %p98 = scmp.ne.s32.totalorder %s89, %s90
      %p99 = scmp.eq.s32.totalorder %s16, 0
      %p100 = por %p98, %p99
      %p101 = scmp.ne.s32.totalorder %s89, %s90
      %p102 = scmp.eq.s32.totalorder %s17, 1
      %p103 = por %p101, %p102
      %p105 = scmp.ne.s32.totalorder %s90, %s104
      %p106 = scmp.eq.s32.totalorder %s17, 0
      %p107 = por %p105, %p106
      %s108 = ssub.s32 %s11, %s18
      %p109 = scmp.eq.s32.totalorder %s108, 0
      %s111 = sadd.s32 %s110, 1
      %s112 = scalar_select %p109, %s110, %s111
      %p115 = pneg %p109
      %p116 = scmp.eq.s32.totalorder %s11, 1
      %p117 = por %p115, %p116
      %p118 = scmp.ne.s32.totalorder %s110, %s113
      %p119 = scmp.eq.s32.totalorder %s11, 0
      %p120 = por %p118, %p119
      %p121 = scmp.ne.s32.totalorder %s110, %s113
      %p122 = scmp.eq.s32.totalorder %s16, 1
      %p123 = por %p121, %p122
      %p124 = scmp.ne.s32.totalorder %s113, %s114
      %p125 = scmp.eq.s32.totalorder %s16, 0
      %p126 = por %p124, %p125
      %p127 = scmp.ne.s32.totalorder %s113, %s114
      %p128 = scmp.eq.s32.totalorder %s17, 1
      %p129 = por %p127, %p128
      %p131 = scmp.ne.s32.totalorder %s114, %s130
      %p132 = scmp.eq.s32.totalorder %s17, 0
      %p133 = por %p131, %p132
      %p134 = scmp.le.s32.totalorder 1, %s11
      %p135 = scmp.lt.s32.totalorder %s11, 3
      %p136 = pnand %p134, %p135
      %p137 = pneg %p136
      // Predicated region
      $region9: #{_fused_forward.1} parent=5 // pred_check
        _
      $region10: #{_fused_forward.1} parent=5 // pred_check_branch
        %139 = sbr.rel (%p136) target = $region12
      $region11: #{_fused_forward.1} parent=5 // pred_region
        %s140 = ssub.s32 %s11, 1
        // Predicated region
        $region13: #{_fused_forward.1} parent=11 // pred_check
          %p141 = pneg %p58
        $region14: #{_fused_forward.1} parent=11 // pred_check_branch
          %143 = sbr.rel (%p141) target = $region16
        $region15: #{_fused_forward.1} parent=11 // pred_region
          _
        $region16: #{_fused_forward.1} parent=11 // pred_fallthru
          _
        // Predicated region
        $region17: #{_fused_forward.1} parent=11 // pred_check
          %p144 = pneg %p79
        $region18: #{_fused_forward.1} parent=11 // pred_check_branch
          %146 = sbr.rel (%p144) target = $region20
        $region19: #{_fused_forward.1} parent=11 // pred_region
          %s148 = ssub.s32 49152, 49152
          %149 = vsyncadd [#allocation3], %s148
          %s150 = sshll.u32 [#allocation2], 4
          %s151 = int_to_ptr.vmem [resolvable:$true] %s150
          %156 = dma.hbm_to_vmem [thread:$0]  %s2, 49152, %s151, [#allocation3], 768, 768, 48
        $region20: #{_fused_forward.1} parent=11 // pred_fallthru
          _
        // Predicated region
        $region21: #{_fused_forward.1} parent=11 // pred_check
          %p157 = pneg %p100
        $region22: #{_fused_forward.1} parent=11 // pred_check_branch
          %159 = sbr.rel (%p157) target = $region24
        $region23: #{_fused_forward.1} parent=11 // pred_region
          _
        $region24: #{_fused_forward.1} parent=11 // pred_fallthru
          _
      $region12: #{_fused_forward.1} parent=5 // pred_fallthru
        _
      %p160 = scmp.lt.s32.totalorder %s11, 2
      // Predicated region
      $region25: #{_fused_forward.1} parent=5 // pred_check
        %p161 = pneg %p160
      $region26: #{_fused_forward.1} parent=5 // pred_check_branch
        %163 = sbr.rel (%p161) target = $region28
      $region27: #{_fused_forward.1} parent=5 // pred_region
        // Predicated region
        $region29: #{_fused_forward.1} parent=27 // pred_check
          %p164 = pneg %p31
        $region30: #{_fused_forward.1} parent=27 // pred_check_branch
          %166 = sbr.rel (%p164) target = $region32
        $region31: #{_fused_forward.1} parent=27 // pred_region
          %p167 = scmp.lt.s32.totalorder %s11, 1
          %s168 = scalar_select %p167, %s11, 1
          %s169 = scalar_lea.vmem %s0, %s168
        $region32: #{_fused_forward.1} parent=27 // pred_fallthru
          _
      $region28: #{_fused_forward.1} parent=5 // pred_fallthru
        _
      %p170 = scmp.le.s32.totalorder 1, %s11
      %p171 = scmp.lt.s32.totalorder %s11, 3
      %p172 = pnand %p170, %p171
      %p173 = pneg %p172
      // Predicated region
      $region33: #{_fused_forward.1} parent=5 // pred_check
        _
      $region34: #{_fused_forward.1} parent=5 // pred_check_branch
        %175 = sbr.rel (%p172) target = $region36
      $region35: #{_fused_forward.1} parent=5 // pred_region
        %s176 = ssub.s32 %s11, 1
        // Predicated region
        $region37: #{_fused_forward.1} parent=35 // pred_check
          %p177 = pneg %p79
        $region38: #{_fused_forward.1} parent=35 // pred_check_branch
          %179 = sbr.rel (%p177) target = $region40
        $region39: #{_fused_forward.1} parent=35 // pred_region
          %180 = dma.done [#allocation3], 49152
        $region40: #{_fused_forward.1} parent=35 // pred_fallthru
          _
        %p181 = scmp.lt.s32.totalorder %s16, 1
        %s182 = scalar_select %p181, %s16, 1
        %s183 = scalar_lea.vmem %s0, %s182
        %p184 = pneg %p37
        %p185 = pneg %p34
        %p186 = pneg %p58
        %p187 = pneg %p55
        %p188 = pneg %p79
        %p189 = pneg %p76
        %p190 = pneg %p100
        %p191 = pneg %p97
        %p192 = pneg %p126
        %p193 = pneg %p123
        %p194 = scmp.lt.s32.totalorder %s16, 1
        %s195 = scalar_select %p194, %s16, 1
        %s196 = smul.addr %s195, 2
        %s197 = scalar_lea.vmem %s4, %s196
        %p198 = scmp.lt.s32.totalorder %s16, 1
        %s199 = scalar_select %p198, %s16, 1
        %s200 = scalar_lea.vmem %s0, %s199
        %p201 = scmp.lt.s32.totalorder %s16, 1
        %s202 = scalar_select %p201, %s16, 1
        %s203 = smul.addr %s202, 2
        %s204 = scalar_lea.vmem %s4, %s203
        %v205 = vld [vmem:[%s200] sm:$0x1]
        %v206 = vld [vmem:[%s1] sm:$0xff]
        %v207 = vld [vmem:[%s1 + $0x8] sm:$0xff]
        %v208 = vld [vmem:[%s1 + $0x10] sm:$0xff]
        %v209 = vld [vmem:[%s1 + $0x18] sm:$0xff]
        %v210 = vld [vmem:[%s1 + $0x20] sm:$0xff]
        %v211 = vld [vmem:[%s1 + $0x28] sm:$0xff]
        %v212 = vld [vmem:[%s1 + $0x30] sm:$0xff]
        %v213 = vld [vmem:[%s1 + $0x38] sm:$0xff]
        %v214 = vld [vmem:[%s1 + $0x40] sm:$0xff]
        %v215 = vld [vmem:[%s1 + $0x48] sm:$0xff]
        %v216 = vld [vmem:[%s1 + $0x50] sm:$0xff]
        %v217 = vld [vmem:[%s1 + $0x58] sm:$0xff]
        %v218 = vld [vmem:[%s1 + $0x60] sm:$0xff]
        %v219 = vld [vmem:[%s1 + $0x68] sm:$0xff]
        %v220 = vld [vmem:[%s1 + $0x70] sm:$0xff]
        %v221 = vld [vmem:[%s1 + $0x78] sm:$0xff]
        %v222 = vld [vmem:[%s1 + $0x80] sm:$0xff]
        %v223 = vld [vmem:[%s1 + $0x88] sm:$0xff]
        %v224 = vld [vmem:[%s1 + $0x90] sm:$0xff]
        %v225 = vld [vmem:[%s1 + $0x98] sm:$0xff]
        %v226 = vld [vmem:[%s1 + $0xa0] sm:$0xff]
        %v227 = vld [vmem:[%s1 + $0xa8] sm:$0xff]
        %v228 = vld [vmem:[%s1 + $0xb0] sm:$0xff]
        %v229 = vld [vmem:[%s1 + $0xb8] sm:$0xff]
        %v230 = vld [vmem:[%s1 + $0xc0] sm:$0xff]
        %v231 = vld [vmem:[%s1 + $0xc8] sm:$0xff]
        %v232 = vld [vmem:[%s1 + $0xd0] sm:$0xff]
        %v233 = vld [vmem:[%s1 + $0xd8] sm:$0xff]
        %v234 = vld [vmem:[%s1 + $0xe0] sm:$0xff]
        %v235 = vld [vmem:[%s1 + $0xe8] sm:$0xff]
        %v236 = vld [vmem:[%s1 + $0xf0] sm:$0xff]
        %v237 = vld [vmem:[%s1 + $0xf8] sm:$0xff]
        %v238 = vld [vmem:[%s1 + $0x100] sm:$0xff]
        %v239 = vld [vmem:[%s1 + $0x108] sm:$0xff]
        %v240 = vld [vmem:[%s1 + $0x110] sm:$0xff]
        %v241 = vld [vmem:[%s1 + $0x118] sm:$0xff]
        %v242 = vld [vmem:[%s1 + $0x120] sm:$0xff]
        %v243 = vld [vmem:[%s1 + $0x128] sm:$0xff]
        %v244 = vld [vmem:[%s1 + $0x130] sm:$0xff]
        %v245 = vld [vmem:[%s1 + $0x138] sm:$0xff]
        %v246 = vld [vmem:[%s1 + $0x140] sm:$0xff]
        %v247 = vld [vmem:[%s1 + $0x148] sm:$0xff]
        %v248 = vld [vmem:[%s1 + $0x150] sm:$0xff]
        %v249 = vld [vmem:[%s1 + $0x158] sm:$0xff]
        %v250 = vld [vmem:[%s1 + $0x160] sm:$0xff]
        %v251 = vld [vmem:[%s1 + $0x168] sm:$0xff]
        %v252 = vld [vmem:[%s1 + $0x170] sm:$0xff]
        %v253 = vld [vmem:[%s1 + $0x178] sm:$0xff]
        %v254 = vld [vmem:[%s1 + $0x180] sm:$0xff]
        %v255 = vld [vmem:[%s1 + $0x188] sm:$0xff]
        %v256 = vld [vmem:[%s1 + $0x190] sm:$0xff]
        %v257 = vld [vmem:[%s1 + $0x198] sm:$0xff]
        %v258 = vld [vmem:[%s1 + $0x1a0] sm:$0xff]
        %v259 = vld [vmem:[%s1 + $0x1a8] sm:$0xff]
        %v260 = vld [vmem:[%s1 + $0x1b0] sm:$0xff]
        %v261 = vld [vmem:[%s1 + $0x1b8] sm:$0xff]
        %v262 = vld [vmem:[%s1 + $0x1c0] sm:$0xff]
        %v263 = vld [vmem:[%s1 + $0x1c8] sm:$0xff]
        %v264 = vld [vmem:[%s1 + $0x1d0] sm:$0xff]
        %v265 = vld [vmem:[%s1 + $0x1d8] sm:$0xff]
        %v266 = vld [vmem:[%s1 + $0x1e0] sm:$0xff]
        %v267 = vld [vmem:[%s1 + $0x1e8] sm:$0xff]
        %v268 = vld [vmem:[%s1 + $0x1f0] sm:$0xff]
        %v269 = vld [vmem:[%s1 + $0x1f8] sm:$0xff]
        %270 = vmatprep.subr.mxu0 %v207
        %271 = vmatpush1.msra.mxu0 %v206
        %272 = vmatprep.subr.mxu0 %v211
        %273 = vmatpush1.msra.mxu0 %v210
        %274 = vmatprep.subr.mxu0 %v215
        %275 = vmatpush1.msra.mxu0 %v214
        %276 = vmatprep.subr.mxu0 %v219
        %277 = vmatpush1.msra.mxu0 %v218
        %278 = vmatprep.subr.mxu0 %v223
        %279 = vmatpush1.msra.mxu0 %v222
        %280 = vmatprep.subr.mxu0 %v227
        %281 = vmatpush1.msra.mxu0 %v226
        %282 = vmatprep.subr.mxu0 %v231
        %283 = vmatpush1.msra.mxu0 %v230
        %284 = vmatprep.subr.mxu0 %v235
        %285 = vmatpush1.msra.mxu0 %v234
        %286 = vmatprep.subr.mxu0 %v239
        %287 = vmatpush1.msra.mxu0 %v238
        %288 = vmatprep.subr.mxu0 %v243
        %289 = vmatpush1.msra.mxu0 %v242
        %290 = vmatprep.subr.mxu0 %v247
        %291 = vmatpush1.msra.mxu0 %v246
        %292 = vmatprep.subr.mxu0 %v251
        %293 = vmatpush1.msra.mxu0 %v250
        %294 = vmatprep.subr.mxu0 %v255
        %295 = vmatpush1.msra.mxu0 %v254
        %296 = vmatprep.subr.mxu0 %v259
        %297 = vmatpush1.msra.mxu0 %v258
        %298 = vmatprep.subr.mxu0 %v263
        %299 = vmatpush1.msra.mxu0 %v262
        %300 = vmatprep.subr.mxu0 %v267
        %301 = vmatpush1.msra.mxu0 %v266
        %302 = vmatprep.subr.mxu0 0.0
        %303 = vmatpush1.msra.mxu0 0.0
        %304 = vmatprep.subr.mxu0 0.0
        %305 = vmatpush1.msra.mxu0 0.0
        %306 = vmatprep.subr.mxu0 0.0
        %307 = vmatpush1.msra.mxu0 0.0
        %308 = vmatprep.subr.mxu0 0.0
        %309 = vmatpush1.msra.mxu0 0.0
        %310 = vmatprep.subr.mxu0 0.0
        %311 = vmatpush1.msra.mxu0 0.0
        %312 = vmatprep.subr.mxu0 0.0
        %313 = vmatpush1.msra.mxu0 0.0
        %314 = vmatprep.subr.mxu0 0.0
        %315 = vmatpush1.msra.mxu0 0.0
        %316 = vmatprep.subr.mxu0 0.0
        %317 = vmatpush1.msra.mxu0 0.0
        %318 = vmatprep.subr.mxu0 0.0
        %319 = vmatpush1.msra.mxu0 0.0
        %320 = vmatprep.subr.mxu0 0.0
        %321 = vmatpush1.msra.mxu0 0.0
        %322 = vmatprep.subr.mxu0 0.0
        %323 = vmatpush1.msra.mxu0 0.0
        %324 = vmatprep.subr.mxu0 0.0
        %325 = vmatpush1.msra.mxu0 0.0
        %326 = vmatprep.subr.mxu0 0.0
        %327 = vmatpush1.msra.mxu0 0.0
        %328 = vmatprep.subr.mxu0 0.0
        %329 = vmatpush1.msra.mxu0 0.0
        %330 = vmatprep.subr.mxu0 0.0
        %331 = vmatpush1.msra.mxu0 0.0
        %332 = vmatprep.subr.mxu0 0.0
        %333 = vmatpush1.msra.mxu0 0.0
        %334 = vmatprep.mubr.f32.mxu0 0.0
        %335 = vmatmul.mubr.f32.gmra.mrb[0].mxu0 %v205
        %v336 = vpop.f32.mrb[0].mxu0
        %v337 = vadd.f32 0.0, %v336
        %v338 = vpop.f32.mrb[0].mxu0
        %v339 = vadd.f32 0.0, %v338
        %340 = vdwg.mxu0
        %341 = vmatprep.subr.mxu0 %v209
        %342 = vmatpush1.msra.mxu0 %v208
        %343 = vmatprep.subr.mxu0 %v213
        %344 = vmatpush1.msra.mxu0 %v212
        %345 = vmatprep.subr.mxu0 %v217
        %346 = vmatpush1.msra.mxu0 %v216
        %347 = vmatprep.subr.mxu0 %v221
        %348 = vmatpush1.msra.mxu0 %v220
        %349 = vmatprep.subr.mxu0 %v225
        %350 = vmatpush1.msra.mxu0 %v224
        %351 = vmatprep.subr.mxu0 %v229
        %352 = vmatpush1.msra.mxu0 %v228
        %353 = vmatprep.subr.mxu0 %v233
        %354 = vmatpush1.msra.mxu0 %v232
        %355 = vmatprep.subr.mxu0 %v237
        %356 = vmatpush1.msra.mxu0 %v236
        %357 = vmatprep.subr.mxu0 %v241
        %358 = vmatpush1.msra.mxu0 %v240
        %359 = vmatprep.subr.mxu0 %v245
        %360 = vmatpush1.msra.mxu0 %v244
        %361 = vmatprep.subr.mxu0 %v249
        %362 = vmatpush1.msra.mxu0 %v248
        %363 = vmatprep.subr.mxu0 %v253
        %364 = vmatpush1.msra.mxu0 %v252
        %365 = vmatprep.subr.mxu0 %v257
        %366 = vmatpush1.msra.mxu0 %v256
        %367 = vmatprep.subr.mxu0 %v261
        %368 = vmatpush1.msra.mxu0 %v260
        %369 = vmatprep.subr.mxu0 %v265
        %370 = vmatpush1.msra.mxu0 %v264
        %371 = vmatprep.subr.mxu0 %v269
        %372 = vmatpush1.msra.mxu0 %v268
        %373 = vmatprep.subr.mxu0 0.0
        %374 = vmatpush1.msra.mxu0 0.0
        %375 = vmatprep.subr.mxu0 0.0
        %376 = vmatpush1.msra.mxu0 0.0
        %377 = vmatprep.subr.mxu0 0.0
        %378 = vmatpush1.msra.mxu0 0.0
        %379 = vmatprep.subr.mxu0 0.0
        %380 = vmatpush1.msra.mxu0 0.0
        %381 = vmatprep.subr.mxu0 0.0
        %382 = vmatpush1.msra.mxu0 0.0
        %383 = vmatprep.subr.mxu0 0.0
        %384 = vmatpush1.msra.mxu0 0.0
        %385 = vmatprep.subr.mxu0 0.0
        %386 = vmatpush1.msra.mxu0 0.0
        %387 = vmatprep.subr.mxu0 0.0
        %388 = vmatpush1.msra.mxu0 0.0
        %389 = vmatprep.subr.mxu0 0.0
        %390 = vmatpush1.msra.mxu0 0.0
        %391 = vmatprep.subr.mxu0 0.0
        %392 = vmatpush1.msra.mxu0 0.0
        %393 = vmatprep.subr.mxu0 0.0
        %394 = vmatpush1.msra.mxu0 0.0
        %395 = vmatprep.subr.mxu0 0.0
        %396 = vmatpush1.msra.mxu0 0.0
        %397 = vmatprep.subr.mxu0 0.0
        %398 = vmatpush1.msra.mxu0 0.0
        %399 = vmatprep.subr.mxu0 0.0
        %400 = vmatpush1.msra.mxu0 0.0
        %401 = vmatprep.subr.mxu0 0.0
        %402 = vmatpush1.msra.mxu0 0.0
        %403 = vmatprep.subr.mxu0 0.0
        %404 = vmatpush1.msra.mxu0 0.0
        %405 = vmatprep.mubr.f32.mxu0 0.0
        %406 = vmatmul.mubr.f32.gmra.mrb[0].mxu0 %v205
        %v407 = vpop.f32.mrb[0].mxu0
        %v408 = vadd.f32 0.0, %v407
        %v409 = vpop.f32.mrb[0].mxu0
        %v410 = vadd.f32 0.0, %v409
        %411 = vdwg.mxu0
        %v412 = vld [vmem:[#allocation2] sm:$0xff]
        %v413 = vld [vmem:[#allocation2 + $0x8] sm:$0xff]
        %v414 = vld [vmem:[#allocation2 + $0x10] sm:$0xff]
        %v415 = vld [vmem:[#allocation2 + $0x18] sm:$0xff]
        %v416 = vld [vmem:[#allocation2 + $0x20] sm:$0xff]
        %v417 = vld [vmem:[#allocation2 + $0x28] sm:$0xff]
        %v418 = vld [vmem:[#allocation2 + $0x30] sm:$0xff]
        %v419 = vld [vmem:[#allocation2 + $0x38] sm:$0xff]
        %v420 = vld [vmem:[#allocation2 + $0x40] sm:$0xff]
        %v421 = vld [vmem:[#allocation2 + $0x48] sm:$0xff]
        %v422 = vld [vmem:[#allocation2 + $0x50] sm:$0xff]
        %v423 = vld [vmem:[#allocation2 + $0x58] sm:$0xff]
        %v424 = vld [vmem:[#allocation2 + $0x60] sm:$0xff]
        %v425 = vld [vmem:[#allocation2 + $0x68] sm:$0xff]
        %v426 = vld [vmem:[#allocation2 + $0x70] sm:$0xff]
        %v427 = vld [vmem:[#allocation2 + $0x78] sm:$0xff]
        %v428 = vld [vmem:[#allocation2 + $0x80] sm:$0xff]
        %v429 = vld [vmem:[#allocation2 + $0x88] sm:$0xff]
        %v430 = vld [vmem:[#allocation2 + $0x90] sm:$0xff]
        %v431 = vld [vmem:[#allocation2 + $0x98] sm:$0xff]
        %v432 = vld [vmem:[#allocation2 + $0xa0] sm:$0xff]
        %v433 = vld [vmem:[#allocation2 + $0xa8] sm:$0xff]
        %v434 = vld [vmem:[#allocation2 + $0xb0] sm:$0xff]
        %v435 = vld [vmem:[#allocation2 + $0xb8] sm:$0xff]
        %v436 = vld [vmem:[#allocation2 + $0xc0] sm:$0xff]
        %v437 = vld [vmem:[#allocation2 + $0xc8] sm:$0xff]
        %v438 = vld [vmem:[#allocation2 + $0xd0] sm:$0xff]
        %v439 = vld [vmem:[#allocation2 + $0xd8] sm:$0xff]
        %v440 = vld [vmem:[#allocation2 + $0xe0] sm:$0xff]
        %v441 = vld [vmem:[#allocation2 + $0xe8] sm:$0xff]
        %v442 = vld [vmem:[#allocation2 + $0xf0] sm:$0xff]
        %v443 = vld [vmem:[#allocation2 + $0xf8] sm:$0xff]
        %v444 = vld [vmem:[#allocation2 + $0x100] sm:$0xff]
        %v445 = vld [vmem:[#allocation2 + $0x108] sm:$0xff]
        %v446 = vld [vmem:[#allocation2 + $0x110] sm:$0xff]
        %v447 = vld [vmem:[#allocation2 + $0x118] sm:$0xff]
        %v448 = vld [vmem:[#allocation2 + $0x120] sm:$0xff]
        %v449 = vld [vmem:[#allocation2 + $0x128] sm:$0xff]
        %v450 = vld [vmem:[#allocation2 + $0x130] sm:$0xff]
        %v451 = vld [vmem:[#allocation2 + $0x138] sm:$0xff]
        %v452 = vld [vmem:[#allocation2 + $0x140] sm:$0xff]
        %v453 = vld [vmem:[#allocation2 + $0x148] sm:$0xff]
        %v454 = vld [vmem:[#allocation2 + $0x150] sm:$0xff]
        %v455 = vld [vmem:[#allocation2 + $0x158] sm:$0xff]
        %v456 = vld [vmem:[#allocation2 + $0x160] sm:$0xff]
        %v457 = vld [vmem:[#allocation2 + $0x168] sm:$0xff]
        %v458 = vld [vmem:[#allocation2 + $0x170] sm:$0xff]
        %v459 = vld [vmem:[#allocation2 + $0x178] sm:$0xff]
        %v460 = vld [vmem:[#allocation2 + $0x180] sm:$0xff]
        %v461 = vld [vmem:[#allocation2 + $0x188] sm:$0xff]
        %v462 = vld [vmem:[#allocation2 + $0x190] sm:$0xff]
        %v463 = vld [vmem:[#allocation2 + $0x198] sm:$0xff]
        %v464 = vld [vmem:[#allocation2 + $0x1a0] sm:$0xff]
        %v465 = vld [vmem:[#allocation2 + $0x1a8] sm:$0xff]
        %v466 = vld [vmem:[#allocation2 + $0x1b0] sm:$0xff]
        %v467 = vld [vmem:[#allocation2 + $0x1b8] sm:$0xff]
        %v468 = vld [vmem:[#allocation2 + $0x1c0] sm:$0xff]
        %v469 = vld [vmem:[#allocation2 + $0x1c8] sm:$0xff]
        %v470 = vld [vmem:[#allocation2 + $0x1d0] sm:$0xff]
        %v471 = vld [vmem:[#allocation2 + $0x1d8] sm:$0xff]
        %v472 = vld [vmem:[#allocation2 + $0x1e0] sm:$0xff]
        %v473 = vld [vmem:[#allocation2 + $0x1e8] sm:$0xff]
        %v474 = vld [vmem:[#allocation2 + $0x1f0] sm:$0xff]
        %v475 = vld [vmem:[#allocation2 + $0x1f8] sm:$0xff]
        %v476 = vld [vmem:[#allocation2 + $0x200] sm:$0xff]
        %v477 = vld [vmem:[#allocation2 + $0x208] sm:$0xff]
        %v478 = vld [vmem:[#allocation2 + $0x210] sm:$0xff]
        %v479 = vld [vmem:[#allocation2 + $0x218] sm:$0xff]
        %v480 = vld [vmem:[#allocation2 + $0x220] sm:$0xff]
        %v481 = vld [vmem:[#allocation2 + $0x228] sm:$0xff]
        %v482 = vld [vmem:[#allocation2 + $0x230] sm:$0xff]
        %v483 = vld [vmem:[#allocation2 + $0x238] sm:$0xff]
        %v484 = vld [vmem:[#allocation2 + $0x240] sm:$0xff]
        %v485 = vld [vmem:[#allocation2 + $0x248] sm:$0xff]
        %v486 = vld [vmem:[#allocation2 + $0x250] sm:$0xff]
        %v487 = vld [vmem:[#allocation2 + $0x258] sm:$0xff]
        %v488 = vld [vmem:[#allocation2 + $0x260] sm:$0xff]
        %v489 = vld [vmem:[#allocation2 + $0x268] sm:$0xff]
        %v490 = vld [vmem:[#allocation2 + $0x270] sm:$0xff]
        %v491 = vld [vmem:[#allocation2 + $0x278] sm:$0xff]
        %v492 = vld [vmem:[#allocation2 + $0x280] sm:$0xff]
        %v493 = vld [vmem:[#allocation2 + $0x288] sm:$0xff]
        %v494 = vld [vmem:[#allocation2 + $0x290] sm:$0xff]
        %v495 = vld [vmem:[#allocation2 + $0x298] sm:$0xff]
        %v496 = vld [vmem:[#allocation2 + $0x2a0] sm:$0xff]
        %v497 = vld [vmem:[#allocation2 + $0x2a8] sm:$0xff]
        %v498 = vld [vmem:[#allocation2 + $0x2b0] sm:$0xff]
        %v499 = vld [vmem:[#allocation2 + $0x2b8] sm:$0xff]
        %v500 = vld [vmem:[#allocation2 + $0x2c0] sm:$0xff]
        %v501 = vld [vmem:[#allocation2 + $0x2c8] sm:$0xff]
        %v502 = vld [vmem:[#allocation2 + $0x2d0] sm:$0xff]
        %v503 = vld [vmem:[#allocation2 + $0x2d8] sm:$0xff]
        %v504 = vld [vmem:[#allocation2 + $0x2e0] sm:$0xff]
        %v505 = vld [vmem:[#allocation2 + $0x2e8] sm:$0xff]
        %v506 = vld [vmem:[#allocation2 + $0x2f0] sm:$0xff]
        %v507 = vld [vmem:[#allocation2 + $0x2f8] sm:$0xff]
        %v508 = vld [vmem:[#allocation2 + $0x300] sm:$0xff]
        %v509 = vld [vmem:[#allocation2 + $0x308] sm:$0xff]
        %v510 = vld [vmem:[#allocation2 + $0x310] sm:$0xff]
        %v511 = vld [vmem:[#allocation2 + $0x318] sm:$0xff]
        %v512 = vld [vmem:[#allocation2 + $0x320] sm:$0xff]
        %v513 = vld [vmem:[#allocation2 + $0x328] sm:$0xff]
        %v514 = vld [vmem:[#allocation2 + $0x330] sm:$0xff]
        %v515 = vld [vmem:[#allocation2 + $0x338] sm:$0xff]
        %v516 = vld [vmem:[#allocation2 + $0x340] sm:$0xff]
        %v517 = vld [vmem:[#allocation2 + $0x348] sm:$0xff]
        %v518 = vld [vmem:[#allocation2 + $0x350] sm:$0xff]
        %v519 = vld [vmem:[#allocation2 + $0x358] sm:$0xff]
        %v520 = vld [vmem:[#allocation2 + $0x360] sm:$0xff]
        %v521 = vld [vmem:[#allocation2 + $0x368] sm:$0xff]
        %v522 = vld [vmem:[#allocation2 + $0x370] sm:$0xff]
        %v523 = vld [vmem:[#allocation2 + $0x378] sm:$0xff]
        %v524 = vld [vmem:[#allocation2 + $0x380] sm:$0xff]
        %v525 = vld [vmem:[#allocation2 + $0x388] sm:$0xff]
        %v526 = vld [vmem:[#allocation2 + $0x390] sm:$0xff]
        %v527 = vld [vmem:[#allocation2 + $0x398] sm:$0xff]
        %v528 = vld [vmem:[#allocation2 + $0x3a0] sm:$0xff]
        %v529 = vld [vmem:[#allocation2 + $0x3a8] sm:$0xff]
        %v530 = vld [vmem:[#allocation2 + $0x3b0] sm:$0xff]
        %v531 = vld [vmem:[#allocation2 + $0x3b8] sm:$0xff]
        %v532 = vld [vmem:[#allocation2 + $0x3c0] sm:$0xff]
        %v533 = vld [vmem:[#allocation2 + $0x3c8] sm:$0xff]
        %v534 = vld [vmem:[#allocation2 + $0x3d0] sm:$0xff]
        %v535 = vld [vmem:[#allocation2 + $0x3d8] sm:$0xff]
        %v536 = vld [vmem:[#allocation2 + $0x3e0] sm:$0xff]
        %v537 = vld [vmem:[#allocation2 + $0x3e8] sm:$0xff]
        %v538 = vld [vmem:[#allocation2 + $0x3f0] sm:$0xff]
        %v539 = vld [vmem:[#allocation2 + $0x3f8] sm:$0xff]
        %v540 = vld [vmem:[#allocation2 + $0x400] sm:$0xff]
        %v541 = vld [vmem:[#allocation2 + $0x408] sm:$0xff]
        %v542 = vld [vmem:[#allocation2 + $0x410] sm:$0xff]
        %v543 = vld [vmem:[#allocation2 + $0x418] sm:$0xff]
        %v544 = vld [vmem:[#allocation2 + $0x420] sm:$0xff]
        %v545 = vld [vmem:[#allocation2 + $0x428] sm:$0xff]
        %v546 = vld [vmem:[#allocation2 + $0x430] sm:$0xff]
        %v547 = vld [vmem:[#allocation2 + $0x438] sm:$0xff]
        %v548 = vld [vmem:[#allocation2 + $0x440] sm:$0xff]
        %v549 = vld [vmem:[#allocation2 + $0x448] sm:$0xff]
        %v550 = vld [vmem:[#allocation2 + $0x450] sm:$0xff]
        %v551 = vld [vmem:[#allocation2 + $0x458] sm:$0xff]
        %v552 = vld [vmem:[#allocation2 + $0x460] sm:$0xff]
        %v553 = vld [vmem:[#allocation2 + $0x468] sm:$0xff]
        %v554 = vld [vmem:[#allocation2 + $0x470] sm:$0xff]
        %v555 = vld [vmem:[#allocation2 + $0x478] sm:$0xff]
        %v556 = vld [vmem:[#allocation2 + $0x480] sm:$0xff]
        %v557 = vld [vmem:[#allocation2 + $0x488] sm:$0xff]
        %v558 = vld [vmem:[#allocation2 + $0x490] sm:$0xff]
        %v559 = vld [vmem:[#allocation2 + $0x498] sm:$0xff]
        %v560 = vld [vmem:[#allocation2 + $0x4a0] sm:$0xff]
        %v561 = vld [vmem:[#allocation2 + $0x4a8] sm:$0xff]
        %v562 = vld [vmem:[#allocation2 + $0x4b0] sm:$0xff]
        %v563 = vld [vmem:[#allocation2 + $0x4b8] sm:$0xff]
        %v564 = vld [vmem:[#allocation2 + $0x4c0] sm:$0xff]
        %v565 = vld [vmem:[#allocation2 + $0x4c8] sm:$0xff]
        %v566 = vld [vmem:[#allocation2 + $0x4d0] sm:$0xff]
        %v567 = vld [vmem:[#allocation2 + $0x4d8] sm:$0xff]
        %v568 = vld [vmem:[#allocation2 + $0x4e0] sm:$0xff]
        %v569 = vld [vmem:[#allocation2 + $0x4e8] sm:$0xff]
        %v570 = vld [vmem:[#allocation2 + $0x4f0] sm:$0xff]
        %v571 = vld [vmem:[#allocation2 + $0x4f8] sm:$0xff]
        %v572 = vld [vmem:[#allocation2 + $0x500] sm:$0xff]
        %v573 = vld [vmem:[#allocation2 + $0x508] sm:$0xff]
        %v574 = vld [vmem:[#allocation2 + $0x510] sm:$0xff]
        %v575 = vld [vmem:[#allocation2 + $0x518] sm:$0xff]
        %v576 = vld [vmem:[#allocation2 + $0x520] sm:$0xff]
        %v577 = vld [vmem:[#allocation2 + $0x528] sm:$0xff]
        %v578 = vld [vmem:[#allocation2 + $0x530] sm:$0xff]
        %v579 = vld [vmem:[#allocation2 + $0x538] sm:$0xff]
        %v580 = vld [vmem:[#allocation2 + $0x540] sm:$0xff]
        %v581 = vld [vmem:[#allocation2 + $0x548] sm:$0xff]
        %v582 = vld [vmem:[#allocation2 + $0x550] sm:$0xff]
        %v583 = vld [vmem:[#allocation2 + $0x558] sm:$0xff]
        %v584 = vld [vmem:[#allocation2 + $0x560] sm:$0xff]
        %v585 = vld [vmem:[#allocation2 + $0x568] sm:$0xff]
        %v586 = vld [vmem:[#allocation2 + $0x570] sm:$0xff]
        %v587 = vld [vmem:[#allocation2 + $0x578] sm:$0xff]
        %v588 = vld [vmem:[#allocation2 + $0x580] sm:$0xff]
        %v589 = vld [vmem:[#allocation2 + $0x588] sm:$0xff]
        %v590 = vld [vmem:[#allocation2 + $0x590] sm:$0xff]
        %v591 = vld [vmem:[#allocation2 + $0x598] sm:$0xff]
        %v592 = vld [vmem:[#allocation2 + $0x5a0] sm:$0xff]
        %v593 = vld [vmem:[#allocation2 + $0x5a8] sm:$0xff]
        %v594 = vld [vmem:[#allocation2 + $0x5b0] sm:$0xff]
        %v595 = vld [vmem:[#allocation2 + $0x5b8] sm:$0xff]
        %v596 = vld [vmem:[#allocation2 + $0x5c0] sm:$0xff]
        %v597 = vld [vmem:[#allocation2 + $0x5c8] sm:$0xff]
        %v598 = vld [vmem:[#allocation2 + $0x5d0] sm:$0xff]
        %v599 = vld [vmem:[#allocation2 + $0x5d8] sm:$0xff]
        %v600 = vld [vmem:[#allocation2 + $0x5e0] sm:$0xff]
        %v601 = vld [vmem:[#allocation2 + $0x5e8] sm:$0xff]
        %v602 = vld [vmem:[#allocation2 + $0x5f0] sm:$0xff]
        %v603 = vld [vmem:[#allocation2 + $0x5f8] sm:$0xff]
        %v604 = vld [vmem:[#allocation2 + $0x600] sm:$0xff]
        %v605 = vld [vmem:[#allocation2 + $0x608] sm:$0xff]
        %v606 = vld [vmem:[#allocation2 + $0x610] sm:$0xff]
        %v607 = vld [vmem:[#allocation2 + $0x618] sm:$0xff]
        %v608 = vld [vmem:[#allocation2 + $0x620] sm:$0xff]
        %v609 = vld [vmem:[#allocation2 + $0x628] sm:$0xff]
        %v610 = vld [vmem:[#allocation2 + $0x630] sm:$0xff]
        %v611 = vld [vmem:[#allocation2 + $0x638] sm:$0xff]
        %v612 = vld [vmem:[#allocation2 + $0x640] sm:$0xff]
        %v613 = vld [vmem:[#allocation2 + $0x648] sm:$0xff]
        %v614 = vld [vmem:[#allocation2 + $0x650] sm:$0xff]
        %v615 = vld [vmem:[#allocation2 + $0x658] sm:$0xff]
        %v616 = vld [vmem:[#allocation2 + $0x660] sm:$0xff]
        %v617 = vld [vmem:[#allocation2 + $0x668] sm:$0xff]
        %v618 = vld [vmem:[#allocation2 + $0x670] sm:$0xff]
        %v619 = vld [vmem:[#allocation2 + $0x678] sm:$0xff]
        %v620 = vld [vmem:[#allocation2 + $0x680] sm:$0xff]
        %v621 = vld [vmem:[#allocation2 + $0x688] sm:$0xff]
        %v622 = vld [vmem:[#allocation2 + $0x690] sm:$0xff]
        %v623 = vld [vmem:[#allocation2 + $0x698] sm:$0xff]
        %v624 = vld [vmem:[#allocation2 + $0x6a0] sm:$0xff]
        %v625 = vld [vmem:[#allocation2 + $0x6a8] sm:$0xff]
        %v626 = vld [vmem:[#allocation2 + $0x6b0] sm:$0xff]
        %v627 = vld [vmem:[#allocation2 + $0x6b8] sm:$0xff]
        %v628 = vld [vmem:[#allocation2 + $0x6c0] sm:$0xff]
        %v629 = vld [vmem:[#allocation2 + $0x6c8] sm:$0xff]
        %v630 = vld [vmem:[#allocation2 + $0x6d0] sm:$0xff]
        %v631 = vld [vmem:[#allocation2 + $0x6d8] sm:$0xff]
        %v632 = vld [vmem:[#allocation2 + $0x6e0] sm:$0xff]
        %v633 = vld [vmem:[#allocation2 + $0x6e8] sm:$0xff]
        %v634 = vld [vmem:[#allocation2 + $0x6f0] sm:$0xff]
        %v635 = vld [vmem:[#allocation2 + $0x6f8] sm:$0xff]
        %v636 = vld [vmem:[#allocation2 + $0x700] sm:$0xff]
        %v637 = vld [vmem:[#allocation2 + $0x708] sm:$0xff]
        %v638 = vld [vmem:[#allocation2 + $0x710] sm:$0xff]
        %v639 = vld [vmem:[#allocation2 + $0x718] sm:$0xff]
        %v640 = vld [vmem:[#allocation2 + $0x720] sm:$0xff]
        %v641 = vld [vmem:[#allocation2 + $0x728] sm:$0xff]
        %v642 = vld [vmem:[#allocation2 + $0x730] sm:$0xff]
        %v643 = vld [vmem:[#allocation2 + $0x738] sm:$0xff]
        %v644 = vld [vmem:[#allocation2 + $0x740] sm:$0xff]
        %v645 = vld [vmem:[#allocation2 + $0x748] sm:$0xff]
        %v646 = vld [vmem:[#allocation2 + $0x750] sm:$0xff]
        %v647 = vld [vmem:[#allocation2 + $0x758] sm:$0xff]
        %v648 = vld [vmem:[#allocation2 + $0x760] sm:$0xff]
        %v649 = vld [vmem:[#allocation2 + $0x768] sm:$0xff]
        %v650 = vld [vmem:[#allocation2 + $0x770] sm:$0xff]
        %v651 = vld [vmem:[#allocation2 + $0x778] sm:$0xff]
        %v652 = vld [vmem:[#allocation2 + $0x780] sm:$0xff]
        %v653 = vld [vmem:[#allocation2 + $0x788] sm:$0xff]
        %v654 = vld [vmem:[#allocation2 + $0x790] sm:$0xff]
        %v655 = vld [vmem:[#allocation2 + $0x798] sm:$0xff]
        %v656 = vld [vmem:[#allocation2 + $0x7a0] sm:$0xff]
        %v657 = vld [vmem:[#allocation2 + $0x7a8] sm:$0xff]
        %v658 = vld [vmem:[#allocation2 + $0x7b0] sm:$0xff]
        %v659 = vld [vmem:[#allocation2 + $0x7b8] sm:$0xff]
        %v660 = vld [vmem:[#allocation2 + $0x7c0] sm:$0xff]
        %v661 = vld [vmem:[#allocation2 + $0x7c8] sm:$0xff]
        %v662 = vld [vmem:[#allocation2 + $0x7d0] sm:$0xff]
        %v663 = vld [vmem:[#allocation2 + $0x7d8] sm:$0xff]
        %v664 = vld [vmem:[#allocation2 + $0x7e0] sm:$0xff]
        %v665 = vld [vmem:[#allocation2 + $0x7e8] sm:$0xff]
        %v666 = vld [vmem:[#allocation2 + $0x7f0] sm:$0xff]
        %v667 = vld [vmem:[#allocation2 + $0x7f8] sm:$0xff]
        %v668 = vld [vmem:[#allocation2 + $0x800] sm:$0xff]
        %v669 = vld [vmem:[#allocation2 + $0x808] sm:$0xff]
        %v670 = vld [vmem:[#allocation2 + $0x810] sm:$0xff]
        %v671 = vld [vmem:[#allocation2 + $0x818] sm:$0xff]
        %v672 = vld [vmem:[#allocation2 + $0x820] sm:$0xff]
        %v673 = vld [vmem:[#allocation2 + $0x828] sm:$0xff]
        %v674 = vld [vmem:[#allocation2 + $0x830] sm:$0xff]
        %v675 = vld [vmem:[#allocation2 + $0x838] sm:$0xff]
        %v676 = vld [vmem:[#allocation2 + $0x840] sm:$0xff]
        %v677 = vld [vmem:[#allocation2 + $0x848] sm:$0xff]
        %v678 = vld [vmem:[#allocation2 + $0x850] sm:$0xff]
        %v679 = vld [vmem:[#allocation2 + $0x858] sm:$0xff]
        %v680 = vld [vmem:[#allocation2 + $0x860] sm:$0xff]
        %v681 = vld [vmem:[#allocation2 + $0x868] sm:$0xff]
        %v682 = vld [vmem:[#allocation2 + $0x870] sm:$0xff]
        %v683 = vld [vmem:[#allocation2 + $0x878] sm:$0xff]
        %v684 = vld [vmem:[#allocation2 + $0x880] sm:$0xff]
        %v685 = vld [vmem:[#allocation2 + $0x888] sm:$0xff]
        %v686 = vld [vmem:[#allocation2 + $0x890] sm:$0xff]
        %v687 = vld [vmem:[#allocation2 + $0x898] sm:$0xff]
        %v688 = vld [vmem:[#allocation2 + $0x8a0] sm:$0xff]
        %v689 = vld [vmem:[#allocation2 + $0x8a8] sm:$0xff]
        %v690 = vld [vmem:[#allocation2 + $0x8b0] sm:$0xff]
        %v691 = vld [vmem:[#allocation2 + $0x8b8] sm:$0xff]
        %v692 = vld [vmem:[#allocation2 + $0x8c0] sm:$0xff]
        %v693 = vld [vmem:[#allocation2 + $0x8c8] sm:$0xff]
        %v694 = vld [vmem:[#allocation2 + $0x8d0] sm:$0xff]
        %v695 = vld [vmem:[#allocation2 + $0x8d8] sm:$0xff]
        %v696 = vld [vmem:[#allocation2 + $0x8e0] sm:$0xff]
        %v697 = vld [vmem:[#allocation2 + $0x8e8] sm:$0xff]
        %v698 = vld [vmem:[#allocation2 + $0x8f0] sm:$0xff]
        %v699 = vld [vmem:[#allocation2 + $0x8f8] sm:$0xff]
        %v700 = vld [vmem:[#allocation2 + $0x900] sm:$0xff]
        %v701 = vld [vmem:[#allocation2 + $0x908] sm:$0xff]
        %v702 = vld [vmem:[#allocation2 + $0x910] sm:$0xff]
        %v703 = vld [vmem:[#allocation2 + $0x918] sm:$0xff]
        %v704 = vld [vmem:[#allocation2 + $0x920] sm:$0xff]
        %v705 = vld [vmem:[#allocation2 + $0x928] sm:$0xff]
        %v706 = vld [vmem:[#allocation2 + $0x930] sm:$0xff]
        %v707 = vld [vmem:[#allocation2 + $0x938] sm:$0xff]
        %v708 = vld [vmem:[#allocation2 + $0x940] sm:$0xff]
        %v709 = vld [vmem:[#allocation2 + $0x948] sm:$0xff]
        %v710 = vld [vmem:[#allocation2 + $0x950] sm:$0xff]
        %v711 = vld [vmem:[#allocation2 + $0x958] sm:$0xff]
        %v712 = vld [vmem:[#allocation2 + $0x960] sm:$0xff]
        %v713 = vld [vmem:[#allocation2 + $0x968] sm:$0xff]
        %v714 = vld [vmem:[#allocation2 + $0x970] sm:$0xff]
        %v715 = vld [vmem:[#allocation2 + $0x978] sm:$0xff]
        %v716 = vld [vmem:[#allocation2 + $0x980] sm:$0xff]
        %v717 = vld [vmem:[#allocation2 + $0x988] sm:$0xff]
        %v718 = vld [vmem:[#allocation2 + $0x990] sm:$0xff]
        %v719 = vld [vmem:[#allocation2 + $0x998] sm:$0xff]
        %v720 = vld [vmem:[#allocation2 + $0x9a0] sm:$0xff]
        %v721 = vld [vmem:[#allocation2 + $0x9a8] sm:$0xff]
        %v722 = vld [vmem:[#allocation2 + $0x9b0] sm:$0xff]
        %v723 = vld [vmem:[#allocation2 + $0x9b8] sm:$0xff]
        %v724 = vld [vmem:[#allocation2 + $0x9c0] sm:$0xff]
        %v725 = vld [vmem:[#allocation2 + $0x9c8] sm:$0xff]
        %v726 = vld [vmem:[#allocation2 + $0x9d0] sm:$0xff]
        %v727 = vld [vmem:[#allocation2 + $0x9d8] sm:$0xff]
        %v728 = vld [vmem:[#allocation2 + $0x9e0] sm:$0xff]
        %v729 = vld [vmem:[#allocation2 + $0x9e8] sm:$0xff]
        %v730 = vld [vmem:[#allocation2 + $0x9f0] sm:$0xff]
        %v731 = vld [vmem:[#allocation2 + $0x9f8] sm:$0xff]
        %v732 = vld [vmem:[#allocation2 + $0xa00] sm:$0xff]
        %v733 = vld [vmem:[#allocation2 + $0xa08] sm:$0xff]
        %v734 = vld [vmem:[#allocation2 + $0xa10] sm:$0xff]
        %v735 = vld [vmem:[#allocation2 + $0xa18] sm:$0xff]
        %v736 = vld [vmem:[#allocation2 + $0xa20] sm:$0xff]
        %v737 = vld [vmem:[#allocation2 + $0xa28] sm:$0xff]
        %v738 = vld [vmem:[#allocation2 + $0xa30] sm:$0xff]
        %v739 = vld [vmem:[#allocation2 + $0xa38] sm:$0xff]
        %v740 = vld [vmem:[#allocation2 + $0xa40] sm:$0xff]
        %v741 = vld [vmem:[#allocation2 + $0xa48] sm:$0xff]
        %v742 = vld [vmem:[#allocation2 + $0xa50] sm:$0xff]
        %v743 = vld [vmem:[#allocation2 + $0xa58] sm:$0xff]
        %v744 = vld [vmem:[#allocation2 + $0xa60] sm:$0xff]
        %v745 = vld [vmem:[#allocation2 + $0xa68] sm:$0xff]
        %v746 = vld [vmem:[#allocation2 + $0xa70] sm:$0xff]
        %v747 = vld [vmem:[#allocation2 + $0xa78] sm:$0xff]
        %v748 = vld [vmem:[#allocation2 + $0xa80] sm:$0xff]
        %v749 = vld [vmem:[#allocation2 + $0xa88] sm:$0xff]
        %v750 = vld [vmem:[#allocation2 + $0xa90] sm:$0xff]
        %v751 = vld [vmem:[#allocation2 + $0xa98] sm:$0xff]
        %v752 = vld [vmem:[#allocation2 + $0xaa0] sm:$0xff]
        %v753 = vld [vmem:[#allocation2 + $0xaa8] sm:$0xff]
        %v754 = vld [vmem:[#allocation2 + $0xab0] sm:$0xff]
        %v755 = vld [vmem:[#allocation2 + $0xab8] sm:$0xff]
        %v756 = vld [vmem:[#allocation2 + $0xac0] sm:$0xff]
        %v757 = vld [vmem:[#allocation2 + $0xac8] sm:$0xff]
        %v758 = vld [vmem:[#allocation2 + $0xad0] sm:$0xff]
        %v759 = vld [vmem:[#allocation2 + $0xad8] sm:$0xff]
        %v760 = vld [vmem:[#allocation2 + $0xae0] sm:$0xff]
        %v761 = vld [vmem:[#allocation2 + $0xae8] sm:$0xff]
        %v762 = vld [vmem:[#allocation2 + $0xaf0] sm:$0xff]
        %v763 = vld [vmem:[#allocation2 + $0xaf8] sm:$0xff]
        %v764 = vld [vmem:[#allocation2 + $0xb00] sm:$0xff]
        %v765 = vld [vmem:[#allocation2 + $0xb08] sm:$0xff]
        %v766 = vld [vmem:[#allocation2 + $0xb10] sm:$0xff]
        %v767 = vld [vmem:[#allocation2 + $0xb18] sm:$0xff]
        %v768 = vld [vmem:[#allocation2 + $0xb20] sm:$0xff]
        %v769 = vld [vmem:[#allocation2 + $0xb28] sm:$0xff]
        %v770 = vld [vmem:[#allocation2 + $0xb30] sm:$0xff]
        %v771 = vld [vmem:[#allocation2 + $0xb38] sm:$0xff]
        %v772 = vld [vmem:[#allocation2 + $0xb40] sm:$0xff]
        %v773 = vld [vmem:[#allocation2 + $0xb48] sm:$0xff]
        %v774 = vld [vmem:[#allocation2 + $0xb50] sm:$0xff]
        %v775 = vld [vmem:[#allocation2 + $0xb58] sm:$0xff]
        %v776 = vld [vmem:[#allocation2 + $0xb60] sm:$0xff]
        %v777 = vld [vmem:[#allocation2 + $0xb68] sm:$0xff]
        %v778 = vld [vmem:[#allocation2 + $0xb70] sm:$0xff]
        %v779 = vld [vmem:[#allocation2 + $0xb78] sm:$0xff]
        %v780 = vld [vmem:[#allocation2 + $0xb80] sm:$0xff]
        %v781 = vld [vmem:[#allocation2 + $0xb88] sm:$0xff]
        %v782 = vld [vmem:[#allocation2 + $0xb90] sm:$0xff]
        %v783 = vld [vmem:[#allocation2 + $0xb98] sm:$0xff]
        %v784 = vld [vmem:[#allocation2 + $0xba0] sm:$0xff]
        %v785 = vld [vmem:[#allocation2 + $0xba8] sm:$0xff]
        %v786 = vld [vmem:[#allocation2 + $0xbb0] sm:$0xff]
        %v787 = vld [vmem:[#allocation2 + $0xbb8] sm:$0xff]
        %v788 = vld [vmem:[#allocation2 + $0xbc0] sm:$0xff]
        %v789 = vld [vmem:[#allocation2 + $0xbc8] sm:$0xff]
        %v790 = vld [vmem:[#allocation2 + $0xbd0] sm:$0xff]
        %v791 = vld [vmem:[#allocation2 + $0xbd8] sm:$0xff]
        %v792 = vld [vmem:[#allocation2 + $0xbe0] sm:$0xff]
        %v793 = vld [vmem:[#allocation2 + $0xbe8] sm:$0xff]
        %v794 = vld [vmem:[#allocation2 + $0xbf0] sm:$0xff]
        %v795 = vld [vmem:[#allocation2 + $0xbf8] sm:$0xff]
        %796 = vmatprep.subr.mxu0 %v413
        %797 = vmatpush1.msra.mxu0 %v412
        %798 = vmatprep.subr.mxu0 %v419
        %799 = vmatpush1.msra.mxu0 %v418
        %800 = vmatprep.subr.mxu0 %v425
        %801 = vmatpush1.msra.mxu0 %v424
        %802 = vmatprep.subr.mxu0 %v431
        %803 = vmatpush1.msra.mxu0 %v430
        %804 = vmatprep.subr.mxu0 %v437
        %805 = vmatpush1.msra.mxu0 %v436
        %806 = vmatprep.subr.mxu0 %v443
        %807 = vmatpush1.msra.mxu0 %v442
        %808 = vmatprep.subr.mxu0 %v449
        %809 = vmatpush1.msra.mxu0 %v448
        %810 = vmatprep.subr.mxu0 %v455
        %811 = vmatpush1.msra.mxu0 %v454
        %812 = vmatprep.subr.mxu0 %v461
        %813 = vmatpush1.msra.mxu0 %v460
        %814 = vmatprep.subr.mxu0 %v467
        %815 = vmatpush1.msra.mxu0 %v466
        %816 = vmatprep.subr.mxu0 %v473
        %817 = vmatpush1.msra.mxu0 %v472
        %818 = vmatprep.subr.mxu0 %v479
        %819 = vmatpush1.msra.mxu0 %v478
        %820 = vmatprep.subr.mxu0 %v485
        %821 = vmatpush1.msra.mxu0 %v484
        %822 = vmatprep.subr.mxu0 %v491
        %823 = vmatpush1.msra.mxu0 %v490
        %824 = vmatprep.subr.mxu0 %v497
        %825 = vmatpush1.msra.mxu0 %v496
        %826 = vmatprep.subr.mxu0 %v503
        %827 = vmatpush1.msra.mxu0 %v502
        %828 = vmatprep.subr.mxu0 %v509
        %829 = vmatpush1.msra.mxu0 %v508
        %830 = vmatprep.subr.mxu0 %v515
        %831 = vmatpush1.msra.mxu0 %v514
        %832 = vmatprep.subr.mxu0 %v521
        %833 = vmatpush1.msra.mxu0 %v520
        %834 = vmatprep.subr.mxu0 %v527
        %835 = vmatpush1.msra.mxu0 %v526
        %836 = vmatprep.subr.mxu0 %v533
        %837 = vmatpush1.msra.mxu0 %v532
        %838 = vmatprep.subr.mxu0 %v539
        %839 = vmatpush1.msra.mxu0 %v538
        %840 = vmatprep.subr.mxu0 %v545
        %841 = vmatpush1.msra.mxu0 %v544
        %842 = vmatprep.subr.mxu0 %v551
        %843 = vmatpush1.msra.mxu0 %v550
        %844 = vmatprep.subr.mxu0 %v557
        %845 = vmatpush1.msra.mxu0 %v556
        %846 = vmatprep.subr.mxu0 %v563
        %847 = vmatpush1.msra.mxu0 %v562
        %848 = vmatprep.subr.mxu0 %v569
        %849 = vmatpush1.msra.mxu0 %v568
        %850 = vmatprep.subr.mxu0 %v575
        %851 = vmatpush1.msra.mxu0 %v574
        %852 = vmatprep.subr.mxu0 %v581
        %853 = vmatpush1.msra.mxu0 %v580
        %854 = vmatprep.subr.mxu0 %v587
        %855 = vmatpush1.msra.mxu0 %v586
        %856 = vmatprep.subr.mxu0 %v593
        %857 = vmatpush1.msra.mxu0 %v592
        %858 = vmatprep.subr.mxu0 %v599
        %859 = vmatpush1.msra.mxu0 %v598
        %860 = vmatprep.mubr.f32.mxu0 %v339
        %861 = vmatmul.mubr.f32.gmra.mrb[0].mxu0 %v337
        %v862 = vpop.f32.mrb[0].mxu0
        %v863 = vadd.f32 0.0, %v862
        %v864 = vpop.f32.mrb[0].mxu0
        %v865 = vadd.f32 0.0, %v864
        %866 = vdwg.mxu0
        %867 = vmatprep.subr.mxu0 %v605
        %868 = vmatpush1.msra.mxu0 %v604
        %869 = vmatprep.subr.mxu0 %v611
        %870 = vmatpush1.msra.mxu0 %v610
        %871 = vmatprep.subr.mxu0 %v617
        %872 = vmatpush1.msra.mxu0 %v616
        %873 = vmatprep.subr.mxu0 %v623
        %874 = vmatpush1.msra.mxu0 %v622
        %875 = vmatprep.subr.mxu0 %v629
        %876 = vmatpush1.msra.mxu0 %v628
        %877 = vmatprep.subr.mxu0 %v635
        %878 = vmatpush1.msra.mxu0 %v634
        %879 = vmatprep.subr.mxu0 %v641
        %880 = vmatpush1.msra.mxu0 %v640
        %881 = vmatprep.subr.mxu0 %v647
        %882 = vmatpush1.msra.mxu0 %v646
        %883 = vmatprep.subr.mxu0 %v653
        %884 = vmatpush1.msra.mxu0 %v652
        %885 = vmatprep.subr.mxu0 %v659
        %886 = vmatpush1.msra.mxu0 %v658
        %887 = vmatprep.subr.mxu0 %v665
        %888 = vmatpush1.msra.mxu0 %v664
        %889 = vmatprep.subr.mxu0 %v671
        %890 = vmatpush1.msra.mxu0 %v670
        %891 = vmatprep.subr.mxu0 %v677
        %892 = vmatpush1.msra.mxu0 %v676
        %893 = vmatprep.subr.mxu0 %v683
        %894 = vmatpush1.msra.mxu0 %v682
        %895 = vmatprep.subr.mxu0 %v689
        %896 = vmatpush1.msra.mxu0 %v688
        %897 = vmatprep.subr.mxu0 %v695
        %898 = vmatpush1.msra.mxu0 %v694
        %899 = vmatprep.subr.mxu0 %v701
        %900 = vmatpush1.msra.mxu0 %v700
        %901 = vmatprep.subr.mxu0 %v707
        %902 = vmatpush1.msra.mxu0 %v706
        %903 = vmatprep.subr.mxu0 %v713
        %904 = vmatpush1.msra.mxu0 %v712
        %905 = vmatprep.subr.mxu0 %v719
        %906 = vmatpush1.msra.mxu0 %v718
        %907 = vmatprep.subr.mxu0 %v725
        %908 = vmatpush1.msra.mxu0 %v724
        %909 = vmatprep.subr.mxu0 %v731
        %910 = vmatpush1.msra.mxu0 %v730
        %911 = vmatprep.subr.mxu0 %v737
        %912 = vmatpush1.msra.mxu0 %v736
        %913 = vmatprep.subr.mxu0 %v743
        %914 = vmatpush1.msra.mxu0 %v742
        %915 = vmatprep.subr.mxu0 %v749
        %916 = vmatpush1.msra.mxu0 %v748
        %917 = vmatprep.subr.mxu0 %v755
        %918 = vmatpush1.msra.mxu0 %v754
        %919 = vmatprep.subr.mxu0 %v761
        %920 = vmatpush1.msra.mxu0 %v760
        %921 = vmatprep.subr.mxu0 %v767
        %922 = vmatpush1.msra.mxu0 %v766
        %923 = vmatprep.subr.mxu0 %v773
        %924 = vmatpush1.msra.mxu0 %v772
        %925 = vmatprep.subr.mxu0 %v779
        %926 = vmatpush1.msra.mxu0 %v778
        %927 = vmatprep.subr.mxu0 %v785
        %928 = vmatpush1.msra.mxu0 %v784
        %929 = vmatprep.subr.mxu0 %v791
        %930 = vmatpush1.msra.mxu0 %v790
        %931 = vmatprep.mubr.f32.mxu0 %v410
        %932 = vmatmul.mubr.f32.gmra.mrb[0].mxu0 %v408
        %v933 = vpop.f32.mrb[0].mxu0
        %v934 = vadd.f32 %v863, %v933
        %v935 = vpop.f32.mrb[0].mxu0
        %v936 = vadd.f32 %v865, %v935
        %937 = vdwg.mxu0
        %938 = vmatprep.subr.mxu0 %v415
        %939 = vmatpush1.msra.mxu0 %v414
        %940 = vmatprep.subr.mxu0 %v421
        %941 = vmatpush1.msra.mxu0 %v420
        %942 = vmatprep.subr.mxu0 %v427
        %943 = vmatpush1.msra.mxu0 %v426
        %944 = vmatprep.subr.mxu0 %v433
        %945 = vmatpush1.msra.mxu0 %v432
        %946 = vmatprep.subr.mxu0 %v439
        %947 = vmatpush1.msra.mxu0 %v438
        %948 = vmatprep.subr.mxu0 %v445
        %949 = vmatpush1.msra.mxu0 %v444
        %950 = vmatprep.subr.mxu0 %v451
        %951 = vmatpush1.msra.mxu0 %v450
        %952 = vmatprep.subr.mxu0 %v457
        %953 = vmatpush1.msra.mxu0 %v456
        %954 = vmatprep.subr.mxu0 %v463
        %955 = vmatpush1.msra.mxu0 %v462
        %956 = vmatprep.subr.mxu0 %v469
        %957 = vmatpush1.msra.mxu0 %v468
        %958 = vmatprep.subr.mxu0 %v475
        %959 = vmatpush1.msra.mxu0 %v474
        %960 = vmatprep.subr.mxu0 %v481
        %961 = vmatpush1.msra.mxu0 %v480
        %962 = vmatprep.subr.mxu0 %v487
        %963 = vmatpush1.msra.mxu0 %v486
        %964 = vmatprep.subr.mxu0 %v493
        %965 = vmatpush1.msra.mxu0 %v492
        %966 = vmatprep.subr.mxu0 %v499
        %967 = vmatpush1.msra.mxu0 %v498
        %968 = vmatprep.subr.mxu0 %v505
        %969 = vmatpush1.msra.mxu0 %v504
        %970 = vmatprep.subr.mxu0 %v511
        %971 = vmatpush1.msra.mxu0 %v510
        %972 = vmatprep.subr.mxu0 %v517
        %973 = vmatpush1.msra.mxu0 %v516
        %974 = vmatprep.subr.mxu0 %v523
        %975 = vmatpush1.msra.mxu0 %v522
        %976 = vmatprep.subr.mxu0 %v529
        %977 = vmatpush1.msra.mxu0 %v528
        %978 = vmatprep.subr.mxu0 %v535
        %979 = vmatpush1.msra.mxu0 %v534
        %980 = vmatprep.subr.mxu0 %v541
        %981 = vmatpush1.msra.mxu0 %v540
        %982 = vmatprep.subr.mxu0 %v547
        %983 = vmatpush1.msra.mxu0 %v546
        %984 = vmatprep.subr.mxu0 %v553
        %985 = vmatpush1.msra.mxu0 %v552
        %986 = vmatprep.subr.mxu0 %v559
        %987 = vmatpush1.msra.mxu0 %v558
        %988 = vmatprep.subr.mxu0 %v565
        %989 = vmatpush1.msra.mxu0 %v564
        %990 = vmatprep.subr.mxu0 %v571
        %991 = vmatpush1.msra.mxu0 %v570
        %992 = vmatprep.subr.mxu0 %v577
        %993 = vmatpush1.msra.mxu0 %v576
        %994 = vmatprep.subr.mxu0 %v583
        %995 = vmatpush1.msra.mxu0 %v582
        %996 = vmatprep.subr.mxu0 %v589
        %997 = vmatpush1.msra.mxu0 %v588
        %998 = vmatprep.subr.mxu0 %v595
        %999 = vmatpush1.msra.mxu0 %v594
        %1000 = vmatprep.subr.mxu0 %v601
        %1001 = vmatpush1.msra.mxu0 %v600
        %1002 = vmatprep.mubr.f32.mxu0 %v339
        %1003 = vmatmul.mubr.f32.gmra.mrb[0].mxu0 %v337
        %v1004 = vpop.f32.mrb[0].mxu0
        %v1005 = vadd.f32 0.0, %v1004
        %v1006 = vpop.f32.mrb[0].mxu0
        %v1007 = vadd.f32 0.0, %v1006
        %1008 = vdwg.mxu0
        %1009 = vmatprep.subr.mxu0 %v607
        %1010 = vmatpush1.msra.mxu0 %v606
        %1011 = vmatprep.subr.mxu0 %v613
        %1012 = vmatpush1.msra.mxu0 %v612
        %1013 = vmatprep.subr.mxu0 %v619
        %1014 = vmatpush1.msra.mxu0 %v618
        %1015 = vmatprep.subr.mxu0 %v625
        %1016 = vmatpush1.msra.mxu0 %v624
        %1017 = vmatprep.subr.mxu0 %v631
        %1018 = vmatpush1.msra.mxu0 %v630
        %1019 = vmatprep.subr.mxu0 %v637
        %1020 = vmatpush1.msra.mxu0 %v636
        %1021 = vmatprep.subr.mxu0 %v643
        %1022 = vmatpush1.msra.mxu0 %v642
        %1023 = vmatprep.subr.mxu0 %v649
        %1024 = vmatpush1.msra.mxu0 %v648
        %1025 = vmatprep.subr.mxu0 %v655
        %1026 = vmatpush1.msra.mxu0 %v654
        %1027 = vmatprep.subr.mxu0 %v661
        %1028 = vmatpush1.msra.mxu0 %v660
        %1029 = vmatprep.subr.mxu0 %v667
        %1030 = vmatpush1.msra.mxu0 %v666
        %1031 = vmatprep.subr.mxu0 %v673
        %1032 = vmatpush1.msra.mxu0 %v672
        %1033 = vmatprep.subr.mxu0 %v679
        %1034 = vmatpush1.msra.mxu0 %v678
        %1035 = vmatprep.subr.mxu0 %v685
        %1036 = vmatpush1.msra.mxu0 %v684
        %1037 = vmatprep.subr.mxu0 %v691
        %1038 = vmatpush1.msra.mxu0 %v690
        %1039 = vmatprep.subr.mxu0 %v697
        %1040 = vmatpush1.msra.mxu0 %v696
        %1041 = vmatprep.subr.mxu0 %v703
        %1042 = vmatpush1.msra.mxu0 %v702
        %1043 = vmatprep.subr.mxu0 %v709
        %1044 = vmatpush1.msra.mxu0 %v708
        %1045 = vmatprep.subr.mxu0 %v715
        %1046 = vmatpush1.msra.mxu0 %v714
        %1047 = vmatprep.subr.mxu0 %v721
        %1048 = vmatpush1.msra.mxu0 %v720
        %1049 = vmatprep.subr.mxu0 %v727
        %1050 = vmatpush1.msra.mxu0 %v726
        %1051 = vmatprep.subr.mxu0 %v733
        %1052 = vmatpush1.msra.mxu0 %v732
        %1053 = vmatprep.subr.mxu0 %v739
        %1054 = vmatpush1.msra.mxu0 %v738
        %1055 = vmatprep.subr.mxu0 %v745
        %1056 = vmatpush1.msra.mxu0 %v744
        %1057 = vmatprep.subr.mxu0 %v751
        %1058 = vmatpush1.msra.mxu0 %v750
        %1059 = vmatprep.subr.mxu0 %v757
        %1060 = vmatpush1.msra.mxu0 %v756
        %1061 = vmatprep.subr.mxu0 %v763
        %1062 = vmatpush1.msra.mxu0 %v762
        %1063 = vmatprep.subr.mxu0 %v769
        %1064 = vmatpush1.msra.mxu0 %v768
        %1065 = vmatprep.subr.mxu0 %v775
        %1066 = vmatpush1.msra.mxu0 %v774
        %1067 = vmatprep.subr.mxu0 %v781
        %1068 = vmatpush1.msra.mxu0 %v780
        %1069 = vmatprep.subr.mxu0 %v787
        %1070 = vmatpush1.msra.mxu0 %v786
        %1071 = vmatprep.subr.mxu0 %v793
        %1072 = vmatpush1.msra.mxu0 %v792
        %1073 = vmatprep.mubr.f32.mxu0 %v410
        %1074 = vmatmul.mubr.f32.gmra.mrb[0].mxu0 %v408
        %v1075 = vpop.f32.mrb[0].mxu0
        %v1076 = vadd.f32 %v1005, %v1075
        %v1077 = vpop.f32.mrb[0].mxu0
        %v1078 = vadd.f32 %v1007, %v1077
        %1079 = vdwg.mxu0
        %1080 = vmatprep.subr.mxu0 %v417
        %1081 = vmatpush1.msra.mxu0 %v416
        %1082 = vmatprep.subr.mxu0 %v423
        %1083 = vmatpush1.msra.mxu0 %v422
        %1084 = vmatprep.subr.mxu0 %v429
        %1085 = vmatpush1.msra.mxu0 %v428
        %1086 = vmatprep.subr.mxu0 %v435
        %1087 = vmatpush1.msra.mxu0 %v434
        %1088 = vmatprep.subr.mxu0 %v441
        %1089 = vmatpush1.msra.mxu0 %v440
        %1090 = vmatprep.subr.mxu0 %v447
        %1091 = vmatpush1.msra.mxu0 %v446
        %1092 = vmatprep.subr.mxu0 %v453
        %1093 = vmatpush1.msra.mxu0 %v452
        %1094 = vmatprep.subr.mxu0 %v459
        %1095 = vmatpush1.msra.mxu0 %v458
        %1096 = vmatprep.subr.mxu0 %v465
        %1097 = vmatpush1.msra.mxu0 %v464
        %1098 = vmatprep.subr.mxu0 %v471
        %1099 = vmatpush1.msra.mxu0 %v470
        %1100 = vmatprep.subr.mxu0 %v477
        %1101 = vmatpush1.msra.mxu0 %v476
        %1102 = vmatprep.subr.mxu0 %v483
        %1103 = vmatpush1.msra.mxu0 %v482
        %1104 = vmatprep.subr.mxu0 %v489
        %1105 = vmatpush1.msra.mxu0 %v488
        %1106 = vmatprep.subr.mxu0 %v495
        %1107 = vmatpush1.msra.mxu0 %v494
        %1108 = vmatprep.subr.mxu0 %v501
        %1109 = vmatpush1.msra.mxu0 %v500
        %1110 = vmatprep.subr.mxu0 %v507
        %1111 = vmatpush1.msra.mxu0 %v506
        %1112 = vmatprep.subr.mxu0 %v513
        %1113 = vmatpush1.msra.mxu0 %v512
        %1114 = vmatprep.subr.mxu0 %v519
        %1115 = vmatpush1.msra.mxu0 %v518
        %1116 = vmatprep.subr.mxu0 %v525
        %1117 = vmatpush1.msra.mxu0 %v524
        %1118 = vmatprep.subr.mxu0 %v531
        %1119 = vmatpush1.msra.mxu0 %v530
        %1120 = vmatprep.subr.mxu0 %v537
        %1121 = vmatpush1.msra.mxu0 %v536
        %1122 = vmatprep.subr.mxu0 %v543
        %1123 = vmatpush1.msra.mxu0 %v542
        %1124 = vmatprep.subr.mxu0 %v549
        %1125 = vmatpush1.msra.mxu0 %v548
        %1126 = vmatprep.subr.mxu0 %v555
        %1127 = vmatpush1.msra.mxu0 %v554
        %1128 = vmatprep.subr.mxu0 %v561
        %1129 = vmatpush1.msra.mxu0 %v560
        %1130 = vmatprep.subr.mxu0 %v567
        %1131 = vmatpush1.msra.mxu0 %v566
        %1132 = vmatprep.subr.mxu0 %v573
        %1133 = vmatpush1.msra.mxu0 %v572
        %1134 = vmatprep.subr.mxu0 %v579
        %1135 = vmatpush1.msra.mxu0 %v578
        %1136 = vmatprep.subr.mxu0 %v585
        %1137 = vmatpush1.msra.mxu0 %v584
        %1138 = vmatprep.subr.mxu0 %v591
        %1139 = vmatpush1.msra.mxu0 %v590
        %1140 = vmatprep.subr.mxu0 %v597
        %1141 = vmatpush1.msra.mxu0 %v596
        %1142 = vmatprep.subr.mxu0 %v603
        %1143 = vmatpush1.msra.mxu0 %v602
        %1144 = vmatprep.mubr.f32.mxu0 %v339
        %1145 = vmatmul.mubr.f32.gmra.mrb[0].mxu0 %v337
        %v1146 = vpop.f32.mrb[0].mxu0
        %v1147 = vadd.f32 0.0, %v1146
        %v1148 = vpop.f32.mrb[0].mxu0
        %v1149 = vadd.f32 0.0, %v1148
        %1150 = vdwg.mxu0
        %1151 = vmatprep.subr.mxu0 %v609
        %1152 = vmatpush1.msra.mxu0 %v608
        %1153 = vmatprep.subr.mxu0 %v615
        %1154 = vmatpush1.msra.mxu0 %v614
        %1155 = vmatprep.subr.mxu0 %v621
        %1156 = vmatpush1.msra.mxu0 %v620
        %1157 = vmatprep.subr.mxu0 %v627
        %1158 = vmatpush1.msra.mxu0 %v626
        %1159 = vmatprep.subr.mxu0 %v633
        %1160 = vmatpush1.msra.mxu0 %v632
        %1161 = vmatprep.subr.mxu0 %v639
        %1162 = vmatpush1.msra.mxu0 %v638
        %1163 = vmatprep.subr.mxu0 %v645
        %1164 = vmatpush1.msra.mxu0 %v644
        %1165 = vmatprep.subr.mxu0 %v651
        %1166 = vmatpush1.msra.mxu0 %v650
        %1167 = vmatprep.subr.mxu0 %v657
        %1168 = vmatpush1.msra.mxu0 %v656
        %1169 = vmatprep.subr.mxu0 %v663
        %1170 = vmatpush1.msra.mxu0 %v662
        %1171 = vmatprep.subr.mxu0 %v669
        %1172 = vmatpush1.msra.mxu0 %v668
        %1173 = vmatprep.subr.mxu0 %v675
        %1174 = vmatpush1.msra.mxu0 %v674
        %1175 = vmatprep.subr.mxu0 %v681
        %1176 = vmatpush1.msra.mxu0 %v680
        %1177 = vmatprep.subr.mxu0 %v687
        %1178 = vmatpush1.msra.mxu0 %v686
        %1179 = vmatprep.subr.mxu0 %v693
        %1180 = vmatpush1.msra.mxu0 %v692
        %1181 = vmatprep.subr.mxu0 %v699
        %1182 = vmatpush1.msra.mxu0 %v698
        %1183 = vmatprep.subr.mxu0 %v705
        %1184 = vmatpush1.msra.mxu0 %v704
        %1185 = vmatprep.subr.mxu0 %v711
        %1186 = vmatpush1.msra.mxu0 %v710
        %1187 = vmatprep.subr.mxu0 %v717
        %1188 = vmatpush1.msra.mxu0 %v716
        %1189 = vmatprep.subr.mxu0 %v723
        %1190 = vmatpush1.msra.mxu0 %v722
        %1191 = vmatprep.subr.mxu0 %v729
        %1192 = vmatpush1.msra.mxu0 %v728
        %1193 = vmatprep.subr.mxu0 %v735
        %1194 = vmatpush1.msra.mxu0 %v734
        %1195 = vmatprep.subr.mxu0 %v741
        %1196 = vmatpush1.msra.mxu0 %v740
        %1197 = vmatprep.subr.mxu0 %v747
        %1198 = vmatpush1.msra.mxu0 %v746
        %1199 = vmatprep.subr.mxu0 %v753
        %1200 = vmatpush1.msra.mxu0 %v752
        %1201 = vmatprep.subr.mxu0 %v759
        %1202 = vmatpush1.msra.mxu0 %v758
        %1203 = vmatprep.subr.mxu0 %v765
        %1204 = vmatpush1.msra.mxu0 %v764
        %1205 = vmatprep.subr.mxu0 %v771
        %1206 = vmatpush1.msra.mxu0 %v770
        %1207 = vmatprep.subr.mxu0 %v777
        %1208 = vmatpush1.msra.mxu0 %v776
        %1209 = vmatprep.subr.mxu0 %v783
        %1210 = vmatpush1.msra.mxu0 %v782
        %1211 = vmatprep.subr.mxu0 %v789
        %1212 = vmatpush1.msra.mxu0 %v788
        %1213 = vmatprep.subr.mxu0 %v795
        %1214 = vmatpush1.msra.mxu0 %v794
        %1215 = vmatprep.mubr.f32.mxu0 %v410
        %1216 = vmatmul.mubr.f32.gmra.mrb[0].mxu0 %v408
        %v1217 = vpop.f32.mrb[0].mxu0
        %v1218 = vadd.f32 %v1147, %v1217
        %v1219 = vpop.f32.mrb[0].mxu0
        %v1220 = vadd.f32 %v1149, %v1219
        %1221 = vdwg.mxu0
        %v1222 = vld [vmem:[%s3] sm:$0xff]
        %v1223 = vld [vmem:[%s3 + $0x8] sm:$0xff]
        %v1224 = vld [vmem:[%s3 + $0x10] sm:$0xff]
        %v1225 = vld [vmem:[%s3 + $0x18] sm:$0xff]
        %v1226 = vld [vmem:[%s3 + $0x20] sm:$0xff]
        %v1227 = vld [vmem:[%s3 + $0x28] sm:$0xff]
        %v1228 = vld [vmem:[%s3 + $0x30] sm:$0xff]
        %v1229 = vld [vmem:[%s3 + $0x38] sm:$0xff]
        %v1230 = vld [vmem:[%s3 + $0x40] sm:$0xff]
        %v1231 = vld [vmem:[%s3 + $0x48] sm:$0xff]
        %v1232 = vld [vmem:[%s3 + $0x50] sm:$0xff]
        %v1233 = vld [vmem:[%s3 + $0x58] sm:$0xff]
        %v1234 = vld [vmem:[%s3 + $0x60] sm:$0xff]
        %v1235 = vld [vmem:[%s3 + $0x68] sm:$0xff]
        %v1236 = vld [vmem:[%s3 + $0x70] sm:$0xff]
        %v1237 = vld [vmem:[%s3 + $0x78] sm:$0xff]
        %v1238 = vld [vmem:[%s3 + $0x80] sm:$0xff]
        %v1239 = vld [vmem:[%s3 + $0x88] sm:$0xff]
        %v1240 = vld [vmem:[%s3 + $0x90] sm:$0xff]
        %v1241 = vld [vmem:[%s3 + $0x98] sm:$0xff]
        %v1242 = vld [vmem:[%s3 + $0xa0] sm:$0xff]
        %v1243 = vld [vmem:[%s3 + $0xa8] sm:$0xff]
        %v1244 = vld [vmem:[%s3 + $0xb0] sm:$0xff]
        %v1245 = vld [vmem:[%s3 + $0xb8] sm:$0xff]
        %v1246 = vld [vmem:[%s3 + $0xc0] sm:$0xff]
        %v1247 = vld [vmem:[%s3 + $0xc8] sm:$0xff]
        %v1248 = vld [vmem:[%s3 + $0xd0] sm:$0xff]
        %v1249 = vld [vmem:[%s3 + $0xd8] sm:$0xff]
        %v1250 = vld [vmem:[%s3 + $0xe0] sm:$0xff]
        %v1251 = vld [vmem:[%s3 + $0xe8] sm:$0xff]
        %v1252 = vld [vmem:[%s3 + $0xf0] sm:$0xff]
        %v1253 = vld [vmem:[%s3 + $0xf8] sm:$0xff]
        %v1254 = vld [vmem:[%s3 + $0x100] sm:$0xff]
        %v1255 = vld [vmem:[%s3 + $0x108] sm:$0xff]
        %v1256 = vld [vmem:[%s3 + $0x110] sm:$0xff]
        %v1257 = vld [vmem:[%s3 + $0x118] sm:$0xff]
        %v1258 = vld [vmem:[%s3 + $0x120] sm:$0xff]
        %v1259 = vld [vmem:[%s3 + $0x128] sm:$0xff]
        %v1260 = vld [vmem:[%s3 + $0x130] sm:$0xff]
        %v1261 = vld [vmem:[%s3 + $0x138] sm:$0xff]
        %v1262 = vld [vmem:[%s3 + $0x140] sm:$0xff]
        %v1263 = vld [vmem:[%s3 + $0x148] sm:$0xff]
        %v1264 = vld [vmem:[%s3 + $0x150] sm:$0xff]
        %v1265 = vld [vmem:[%s3 + $0x158] sm:$0xff]
        %v1266 = vld [vmem:[%s3 + $0x160] sm:$0xff]
        %v1267 = vld [vmem:[%s3 + $0x168] sm:$0xff]
        %v1268 = vld [vmem:[%s3 + $0x170] sm:$0xff]
        %v1269 = vld [vmem:[%s3 + $0x178] sm:$0xff]
        %v1270 = vld [vmem:[%s3 + $0x180] sm:$0xff]
        %v1271 = vld [vmem:[%s3 + $0x188] sm:$0xff]
        %v1272 = vld [vmem:[%s3 + $0x190] sm:$0xff]
        %v1273 = vld [vmem:[%s3 + $0x198] sm:$0xff]
        %v1274 = vld [vmem:[%s3 + $0x1a0] sm:$0xff]
        %v1275 = vld [vmem:[%s3 + $0x1a8] sm:$0xff]
        %v1276 = vld [vmem:[%s3 + $0x1b0] sm:$0xff]
        %v1277 = vld [vmem:[%s3 + $0x1b8] sm:$0xff]
        %v1278 = vld [vmem:[%s3 + $0x1c0] sm:$0xff]
        %v1279 = vld [vmem:[%s3 + $0x1c8] sm:$0xff]
        %v1280 = vld [vmem:[%s3 + $0x1d0] sm:$0xff]
        %v1281 = vld [vmem:[%s3 + $0x1d8] sm:$0xff]
        %v1282 = vld [vmem:[%s3 + $0x1e0] sm:$0xff]
        %v1283 = vld [vmem:[%s3 + $0x1e8] sm:$0xff]
        %v1284 = vld [vmem:[%s3 + $0x1f0] sm:$0xff]
        %v1285 = vld [vmem:[%s3 + $0x1f8] sm:$0xff]
        %v1286 = vld [vmem:[%s3 + $0x200] sm:$0xff]
        %v1287 = vld [vmem:[%s3 + $0x208] sm:$0xff]
        %v1288 = vld [vmem:[%s3 + $0x210] sm:$0xff]
        %v1289 = vld [vmem:[%s3 + $0x218] sm:$0xff]
        %v1290 = vld [vmem:[%s3 + $0x220] sm:$0xff]
        %v1291 = vld [vmem:[%s3 + $0x228] sm:$0xff]
        %v1292 = vld [vmem:[%s3 + $0x230] sm:$0xff]
        %v1293 = vld [vmem:[%s3 + $0x238] sm:$0xff]
        %v1294 = vld [vmem:[%s3 + $0x240] sm:$0xff]
        %v1295 = vld [vmem:[%s3 + $0x248] sm:$0xff]
        %v1296 = vld [vmem:[%s3 + $0x250] sm:$0xff]
        %v1297 = vld [vmem:[%s3 + $0x258] sm:$0xff]
        %v1298 = vld [vmem:[%s3 + $0x260] sm:$0xff]
        %v1299 = vld [vmem:[%s3 + $0x268] sm:$0xff]
        %v1300 = vld [vmem:[%s3 + $0x270] sm:$0xff]
        %v1301 = vld [vmem:[%s3 + $0x278] sm:$0xff]
        %v1302 = vld [vmem:[%s3 + $0x280] sm:$0xff]
        %v1303 = vld [vmem:[%s3 + $0x288] sm:$0xff]
        %v1304 = vld [vmem:[%s3 + $0x290] sm:$0xff]
        %v1305 = vld [vmem:[%s3 + $0x298] sm:$0xff]
        %v1306 = vld [vmem:[%s3 + $0x2a0] sm:$0xff]
        %v1307 = vld [vmem:[%s3 + $0x2a8] sm:$0xff]
        %v1308 = vld [vmem:[%s3 + $0x2b0] sm:$0xff]
        %v1309 = vld [vmem:[%s3 + $0x2b8] sm:$0xff]
        %v1310 = vld [vmem:[%s3 + $0x2c0] sm:$0xff]
        %v1311 = vld [vmem:[%s3 + $0x2c8] sm:$0xff]
        %v1312 = vld [vmem:[%s3 + $0x2d0] sm:$0xff]
        %v1313 = vld [vmem:[%s3 + $0x2d8] sm:$0xff]
        %v1314 = vld [vmem:[%s3 + $0x2e0] sm:$0xff]
        %v1315 = vld [vmem:[%s3 + $0x2e8] sm:$0xff]
        %v1316 = vld [vmem:[%s3 + $0x2f0] sm:$0xff]
        %v1317 = vld [vmem:[%s3 + $0x2f8] sm:$0xff]
        %v1318 = vld [vmem:[%s3 + $0x300] sm:$0xff]
        %v1319 = vld [vmem:[%s3 + $0x308] sm:$0xff]
        %v1320 = vld [vmem:[%s3 + $0x310] sm:$0xff]
        %v1321 = vld [vmem:[%s3 + $0x318] sm:$0xff]
        %v1322 = vld [vmem:[%s3 + $0x320] sm:$0xff]
        %v1323 = vld [vmem:[%s3 + $0x328] sm:$0xff]
        %v1324 = vld [vmem:[%s3 + $0x330] sm:$0xff]
        %v1325 = vld [vmem:[%s3 + $0x338] sm:$0xff]
        %v1326 = vld [vmem:[%s3 + $0x340] sm:$0xff]
        %v1327 = vld [vmem:[%s3 + $0x348] sm:$0xff]
        %v1328 = vld [vmem:[%s3 + $0x350] sm:$0xff]
        %v1329 = vld [vmem:[%s3 + $0x358] sm:$0xff]
        %v1330 = vld [vmem:[%s3 + $0x360] sm:$0xff]
        %v1331 = vld [vmem:[%s3 + $0x368] sm:$0xff]
        %v1332 = vld [vmem:[%s3 + $0x370] sm:$0xff]
        %v1333 = vld [vmem:[%s3 + $0x378] sm:$0xff]
        %v1334 = vld [vmem:[%s3 + $0x380] sm:$0xff]
        %v1335 = vld [vmem:[%s3 + $0x388] sm:$0xff]
        %v1336 = vld [vmem:[%s3 + $0x390] sm:$0xff]
        %v1337 = vld [vmem:[%s3 + $0x398] sm:$0xff]
        %v1338 = vld [vmem:[%s3 + $0x3a0] sm:$0xff]
        %v1339 = vld [vmem:[%s3 + $0x3a8] sm:$0xff]
        %v1340 = vld [vmem:[%s3 + $0x3b0] sm:$0xff]
        %v1341 = vld [vmem:[%s3 + $0x3b8] sm:$0xff]
        %v1342 = vld [vmem:[%s3 + $0x3c0] sm:$0xff]
        %v1343 = vld [vmem:[%s3 + $0x3c8] sm:$0xff]
        %v1344 = vld [vmem:[%s3 + $0x3d0] sm:$0xff]
        %v1345 = vld [vmem:[%s3 + $0x3d8] sm:$0xff]
        %v1346 = vld [vmem:[%s3 + $0x3e0] sm:$0xff]
        %v1347 = vld [vmem:[%s3 + $0x3e8] sm:$0xff]
        %v1348 = vld [vmem:[%s3 + $0x3f0] sm:$0xff]
        %v1349 = vld [vmem:[%s3 + $0x3f8] sm:$0xff]
        %v1350 = vld [vmem:[%s3 + $0x400] sm:$0xff]
        %v1351 = vld [vmem:[%s3 + $0x408] sm:$0xff]
        %v1352 = vld [vmem:[%s3 + $0x410] sm:$0xff]
        %v1353 = vld [vmem:[%s3 + $0x418] sm:$0xff]
        %v1354 = vld [vmem:[%s3 + $0x420] sm:$0xff]
        %v1355 = vld [vmem:[%s3 + $0x428] sm:$0xff]
        %v1356 = vld [vmem:[%s3 + $0x430] sm:$0xff]
        %v1357 = vld [vmem:[%s3 + $0x438] sm:$0xff]
        %v1358 = vld [vmem:[%s3 + $0x440] sm:$0xff]
        %v1359 = vld [vmem:[%s3 + $0x448] sm:$0xff]
        %v1360 = vld [vmem:[%s3 + $0x450] sm:$0xff]
        %v1361 = vld [vmem:[%s3 + $0x458] sm:$0xff]
        %v1362 = vld [vmem:[%s3 + $0x460] sm:$0xff]
        %v1363 = vld [vmem:[%s3 + $0x468] sm:$0xff]
        %v1364 = vld [vmem:[%s3 + $0x470] sm:$0xff]
        %v1365 = vld [vmem:[%s3 + $0x478] sm:$0xff]
        %v1366 = vld [vmem:[%s3 + $0x480] sm:$0xff]
        %v1367 = vld [vmem:[%s3 + $0x488] sm:$0xff]
        %v1368 = vld [vmem:[%s3 + $0x490] sm:$0xff]
        %v1369 = vld [vmem:[%s3 + $0x498] sm:$0xff]
        %v1370 = vld [vmem:[%s3 + $0x4a0] sm:$0xff]
        %v1371 = vld [vmem:[%s3 + $0x4a8] sm:$0xff]
        %v1372 = vld [vmem:[%s3 + $0x4b0] sm:$0xff]
        %v1373 = vld [vmem:[%s3 + $0x4b8] sm:$0xff]
        %v1374 = vld [vmem:[%s3 + $0x4c0] sm:$0xff]
        %v1375 = vld [vmem:[%s3 + $0x4c8] sm:$0xff]
        %v1376 = vld [vmem:[%s3 + $0x4d0] sm:$0xff]
        %v1377 = vld [vmem:[%s3 + $0x4d8] sm:$0xff]
        %v1378 = vld [vmem:[%s3 + $0x4e0] sm:$0xff]
        %v1379 = vld [vmem:[%s3 + $0x4e8] sm:$0xff]
        %v1380 = vld [vmem:[%s3 + $0x4f0] sm:$0xff]
        %v1381 = vld [vmem:[%s3 + $0x4f8] sm:$0xff]
        %v1382 = vld [vmem:[%s3 + $0x500] sm:$0xff]
        %v1383 = vld [vmem:[%s3 + $0x508] sm:$0xff]
        %v1384 = vld [vmem:[%s3 + $0x510] sm:$0xff]
        %v1385 = vld [vmem:[%s3 + $0x518] sm:$0xff]
        %v1386 = vld [vmem:[%s3 + $0x520] sm:$0xff]
        %v1387 = vld [vmem:[%s3 + $0x528] sm:$0xff]
        %v1388 = vld [vmem:[%s3 + $0x530] sm:$0xff]
        %v1389 = vld [vmem:[%s3 + $0x538] sm:$0xff]
        %v1390 = vld [vmem:[%s3 + $0x540] sm:$0xff]
        %v1391 = vld [vmem:[%s3 + $0x548] sm:$0xff]
        %v1392 = vld [vmem:[%s3 + $0x550] sm:$0xff]
        %v1393 = vld [vmem:[%s3 + $0x558] sm:$0xff]
        %v1394 = vld [vmem:[%s3 + $0x560] sm:$0xff]
        %v1395 = vld [vmem:[%s3 + $0x568] sm:$0xff]
        %v1396 = vld [vmem:[%s3 + $0x570] sm:$0xff]
        %v1397 = vld [vmem:[%s3 + $0x578] sm:$0xff]
        %v1398 = vld [vmem:[%s3 + $0x580] sm:$0xff]
        %v1399 = vld [vmem:[%s3 + $0x588] sm:$0xff]
        %v1400 = vld [vmem:[%s3 + $0x590] sm:$0xff]
        %v1401 = vld [vmem:[%s3 + $0x598] sm:$0xff]
        %v1402 = vld [vmem:[%s3 + $0x5a0] sm:$0xff]
        %v1403 = vld [vmem:[%s3 + $0x5a8] sm:$0xff]
        %v1404 = vld [vmem:[%s3 + $0x5b0] sm:$0xff]
        %v1405 = vld [vmem:[%s3 + $0x5b8] sm:$0xff]
        %v1406 = vld [vmem:[%s3 + $0x5c0] sm:$0xff]
        %v1407 = vld [vmem:[%s3 + $0x5c8] sm:$0xff]
        %v1408 = vld [vmem:[%s3 + $0x5d0] sm:$0xff]
        %v1409 = vld [vmem:[%s3 + $0x5d8] sm:$0xff]
        %v1410 = vld [vmem:[%s3 + $0x5e0] sm:$0xff]
        %v1411 = vld [vmem:[%s3 + $0x5e8] sm:$0xff]
        %v1412 = vld [vmem:[%s3 + $0x5f0] sm:$0xff]
        %v1413 = vld [vmem:[%s3 + $0x5f8] sm:$0xff]
        %1414 = vmatprep.subr.mxu0 %v1223
        %1415 = vmatpush1.msra.mxu0 %v1222
        %1416 = vmatprep.subr.mxu0 %v1225
        %1417 = vmatpush1.msra.mxu0 %v1224
        %1418 = vmatprep.subr.mxu0 %v1227
        %1419 = vmatpush1.msra.mxu0 %v1226
        %1420 = vmatprep.subr.mxu0 %v1229
        %1421 = vmatpush1.msra.mxu0 %v1228
        %1422 = vmatprep.subr.mxu0 %v1231
        %1423 = vmatpush1.msra.mxu0 %v1230
        %1424 = vmatprep.subr.mxu0 %v1233
        %1425 = vmatpush1.msra.mxu0 %v1232
        %1426 = vmatprep.subr.mxu0 %v1235
        %1427 = vmatpush1.msra.mxu0 %v1234
        %1428 = vmatprep.subr.mxu0 %v1237
        %1429 = vmatpush1.msra.mxu0 %v1236
        %1430 = vmatprep.subr.mxu0 %v1239
        %1431 = vmatpush1.msra.mxu0 %v1238
        %1432 = vmatprep.subr.mxu0 %v1241
        %1433 = vmatpush1.msra.mxu0 %v1240
        %1434 = vmatprep.subr.mxu0 %v1243
        %1435 = vmatpush1.msra.mxu0 %v1242
        %1436 = vmatprep.subr.mxu0 %v1245
        %1437 = vmatpush1.msra.mxu0 %v1244
        %1438 = vmatprep.subr.mxu0 %v1247
        %1439 = vmatpush1.msra.mxu0 %v1246
        %1440 = vmatprep.subr.mxu0 %v1249
        %1441 = vmatpush1.msra.mxu0 %v1248
        %1442 = vmatprep.subr.mxu0 %v1251
        %1443 = vmatpush1.msra.mxu0 %v1250
        %1444 = vmatprep.subr.mxu0 %v1253
        %1445 = vmatpush1.msra.mxu0 %v1252
        %1446 = vmatprep.subr.mxu0 %v1255
        %1447 = vmatpush1.msra.mxu0 %v1254
        %1448 = vmatprep.subr.mxu0 %v1257
        %1449 = vmatpush1.msra.mxu0 %v1256
        %1450 = vmatprep.subr.mxu0 %v1259
        %1451 = vmatpush1.msra.mxu0 %v1258
        %1452 = vmatprep.subr.mxu0 %v1261
        %1453 = vmatpush1.msra.mxu0 %v1260
        %1454 = vmatprep.subr.mxu0 %v1263
        %1455 = vmatpush1.msra.mxu0 %v1262
        %1456 = vmatprep.subr.mxu0 %v1265
        %1457 = vmatpush1.msra.mxu0 %v1264
        %1458 = vmatprep.subr.mxu0 %v1267
        %1459 = vmatpush1.msra.mxu0 %v1266
        %1460 = vmatprep.subr.mxu0 %v1269
        %1461 = vmatpush1.msra.mxu0 %v1268
        %1462 = vmatprep.subr.mxu0 %v1271
        %1463 = vmatpush1.msra.mxu0 %v1270
        %1464 = vmatprep.subr.mxu0 %v1273
        %1465 = vmatpush1.msra.mxu0 %v1272
        %1466 = vmatprep.subr.mxu0 %v1275
        %1467 = vmatpush1.msra.mxu0 %v1274
        %1468 = vmatprep.subr.mxu0 %v1277
        %1469 = vmatpush1.msra.mxu0 %v1276
        %1470 = vmatprep.subr.mxu0 %v1279
        %1471 = vmatpush1.msra.mxu0 %v1278
        %1472 = vmatprep.subr.mxu0 %v1281
        %1473 = vmatpush1.msra.mxu0 %v1280
        %1474 = vmatprep.subr.mxu0 %v1283
        %1475 = vmatpush1.msra.mxu0 %v1282
        %1476 = vmatprep.subr.mxu0 %v1285
        %1477 = vmatpush1.msra.mxu0 %v1284
        %1478 = vmatprep.mubr.f32.mxu0 %v936
        %1479 = vmatmul.mubr.f32.gmra.mrb[0].mxu0 %v934
        %v1480 = vpop.f32.mrb[0].mxu0
        %v1481 = vadd.f32 0.0, %v1480
        %v1482 = vpop.f32.mrb[0].mxu0
        %v1483 = vadd.f32 0.0, %v1482
        %1484 = vdwg.mxu0
        %1485 = vmatprep.subr.mxu0 %v1287
        %1486 = vmatpush1.msra.mxu0 %v1286
        %1487 = vmatprep.subr.mxu0 %v1289
        %1488 = vmatpush1.msra.mxu0 %v1288
        %1489 = vmatprep.subr.mxu0 %v1291
        %1490 = vmatpush1.msra.mxu0 %v1290
        %1491 = vmatprep.subr.mxu0 %v1293
        %1492 = vmatpush1.msra.mxu0 %v1292
        %1493 = vmatprep.subr.mxu0 %v1295
        %1494 = vmatpush1.msra.mxu0 %v1294
        %1495 = vmatprep.subr.mxu0 %v1297
        %1496 = vmatpush1.msra.mxu0 %v1296
        %1497 = vmatprep.subr.mxu0 %v1299
        %1498 = vmatpush1.msra.mxu0 %v1298
        %1499 = vmatprep.subr.mxu0 %v1301
        %1500 = vmatpush1.msra.mxu0 %v1300
        %1501 = vmatprep.subr.mxu0 %v1303
        %1502 = vmatpush1.msra.mxu0 %v1302
        %1503 = vmatprep.subr.mxu0 %v1305
        %1504 = vmatpush1.msra.mxu0 %v1304
        %1505 = vmatprep.subr.mxu0 %v1307
        %1506 = vmatpush1.msra.mxu0 %v1306
        %1507 = vmatprep.subr.mxu0 %v1309
        %1508 = vmatpush1.msra.mxu0 %v1308
        %1509 = vmatprep.subr.mxu0 %v1311
        %1510 = vmatpush1.msra.mxu0 %v1310
        %1511 = vmatprep.subr.mxu0 %v1313
        %1512 = vmatpush1.msra.mxu0 %v1312
        %1513 = vmatprep.subr.mxu0 %v1315
        %1514 = vmatpush1.msra.mxu0 %v1314
        %1515 = vmatprep.subr.mxu0 %v1317
        %1516 = vmatpush1.msra.mxu0 %v1316
        %1517 = vmatprep.subr.mxu0 %v1319
        %1518 = vmatpush1.msra.mxu0 %v1318
        %1519 = vmatprep.subr.mxu0 %v1321
        %1520 = vmatpush1.msra.mxu0 %v1320
        %1521 = vmatprep.subr.mxu0 %v1323
        %1522 = vmatpush1.msra.mxu0 %v1322
        %1523 = vmatprep.subr.mxu0 %v1325
        %1524 = vmatpush1.msra.mxu0 %v1324
        %1525 = vmatprep.subr.mxu0 %v1327
        %1526 = vmatpush1.msra.mxu0 %v1326
        %1527 = vmatprep.subr.mxu0 %v1329
        %1528 = vmatpush1.msra.mxu0 %v1328
        %1529 = vmatprep.subr.mxu0 %v1331
        %1530 = vmatpush1.msra.mxu0 %v1330
        %1531 = vmatprep.subr.mxu0 %v1333
        %1532 = vmatpush1.msra.mxu0 %v1332
        %1533 = vmatprep.subr.mxu0 %v1335
        %1534 = vmatpush1.msra.mxu0 %v1334
        %1535 = vmatprep.subr.mxu0 %v1337
        %1536 = vmatpush1.msra.mxu0 %v1336
        %1537 = vmatprep.subr.mxu0 %v1339
        %1538 = vmatpush1.msra.mxu0 %v1338
        %1539 = vmatprep.subr.mxu0 %v1341
        %1540 = vmatpush1.msra.mxu0 %v1340
        %1541 = vmatprep.subr.mxu0 %v1343
        %1542 = vmatpush1.msra.mxu0 %v1342
        %1543 = vmatprep.subr.mxu0 %v1345
        %1544 = vmatpush1.msra.mxu0 %v1344
        %1545 = vmatprep.subr.mxu0 %v1347
        %1546 = vmatpush1.msra.mxu0 %v1346
        %1547 = vmatprep.subr.mxu0 %v1349
        %1548 = vmatpush1.msra.mxu0 %v1348
        %1549 = vmatprep.mubr.f32.mxu0 %v1078
        %1550 = vmatmul.mubr.f32.gmra.mrb[0].mxu0 %v1076
        %v1551 = vpop.f32.mrb[0].mxu0
        %v1552 = vadd.f32 %v1481, %v1551
        %v1553 = vpop.f32.mrb[0].mxu0
        %v1554 = vadd.f32 %v1483, %v1553
        %1555 = vdwg.mxu0
        %1556 = vmatprep.subr.mxu0 %v1351
        %1557 = vmatpush1.msra.mxu0 %v1350
        %1558 = vmatprep.subr.mxu0 %v1353
        %1559 = vmatpush1.msra.mxu0 %v1352
        %1560 = vmatprep.subr.mxu0 %v1355
        %1561 = vmatpush1.msra.mxu0 %v1354
        %1562 = vmatprep.subr.mxu0 %v1357
        %1563 = vmatpush1.msra.mxu0 %v1356
        %1564 = vmatprep.subr.mxu0 %v1359
        %1565 = vmatpush1.msra.mxu0 %v1358
        %1566 = vmatprep.subr.mxu0 %v1361
        %1567 = vmatpush1.msra.mxu0 %v1360
        %1568 = vmatprep.subr.mxu0 %v1363
        %1569 = vmatpush1.msra.mxu0 %v1362
        %1570 = vmatprep.subr.mxu0 %v1365
        %1571 = vmatpush1.msra.mxu0 %v1364
        %1572 = vmatprep.subr.mxu0 %v1367
        %1573 = vmatpush1.msra.mxu0 %v1366
        %1574 = vmatprep.subr.mxu0 %v1369
        %1575 = vmatpush1.msra.mxu0 %v1368
        %1576 = vmatprep.subr.mxu0 %v1371
        %1577 = vmatpush1.msra.mxu0 %v1370
        %1578 = vmatprep.subr.mxu0 %v1373
        %1579 = vmatpush1.msra.mxu0 %v1372
        %1580 = vmatprep.subr.mxu0 %v1375
        %1581 = vmatpush1.msra.mxu0 %v1374
        %1582 = vmatprep.subr.mxu0 %v1377
        %1583 = vmatpush1.msra.mxu0 %v1376
        %1584 = vmatprep.subr.mxu0 %v1379
        %1585 = vmatpush1.msra.mxu0 %v1378
        %1586 = vmatprep.subr.mxu0 %v1381
        %1587 = vmatpush1.msra.mxu0 %v1380
        %1588 = vmatprep.subr.mxu0 %v1383
        %1589 = vmatpush1.msra.mxu0 %v1382
        %1590 = vmatprep.subr.mxu0 %v1385
        %1591 = vmatpush1.msra.mxu0 %v1384
        %1592 = vmatprep.subr.mxu0 %v1387
        %1593 = vmatpush1.msra.mxu0 %v1386
        %1594 = vmatprep.subr.mxu0 %v1389
        %1595 = vmatpush1.msra.mxu0 %v1388
        %1596 = vmatprep.subr.mxu0 %v1391
        %1597 = vmatpush1.msra.mxu0 %v1390
        %1598 = vmatprep.subr.mxu0 %v1393
        %1599 = vmatpush1.msra.mxu0 %v1392
        %1600 = vmatprep.subr.mxu0 %v1395
        %1601 = vmatpush1.msra.mxu0 %v1394
        %1602 = vmatprep.subr.mxu0 %v1397
        %1603 = vmatpush1.msra.mxu0 %v1396
        %1604 = vmatprep.subr.mxu0 %v1399
        %1605 = vmatpush1.msra.mxu0 %v1398
        %1606 = vmatprep.subr.mxu0 %v1401
        %1607 = vmatpush1.msra.mxu0 %v1400
        %1608 = vmatprep.subr.mxu0 %v1403
        %1609 = vmatpush1.msra.mxu0 %v1402
        %1610 = vmatprep.subr.mxu0 %v1405
        %1611 = vmatpush1.msra.mxu0 %v1404
        %1612 = vmatprep.subr.mxu0 %v1407
        %1613 = vmatpush1.msra.mxu0 %v1406
        %1614 = vmatprep.subr.mxu0 %v1409
        %1615 = vmatpush1.msra.mxu0 %v1408
        %1616 = vmatprep.subr.mxu0 %v1411
        %1617 = vmatpush1.msra.mxu0 %v1410
        %1618 = vmatprep.subr.mxu0 %v1413
        %1619 = vmatpush1.msra.mxu0 %v1412
        %1620 = vmatprep.mubr.f32.mxu0 %v1220
        %1621 = vmatmul.mubr.f32.gmra.mrb[0].mxu0 %v1218
        %v1622 = vpop.f32.mrb[0].mxu0
        %v1623 = vadd.f32 %v1552, %v1622
        %v1624 = vpop.f32.mrb[0].mxu0
        %v1625 = vadd.f32 %v1554, %v1624
        %1626 = vdwg.mxu0
        %v1629 = vcombine.low %v1623, %v1625
        %v1631 = vunpack.c.l.s4 1966171168
        %v1632 = vunpack.c.0.s8 %v1631
        %v1633 = vlaneseq
        %v1634 = vshrl.u32 %v1633, 7
        %v1635 = vsub.s32 %v1632, %v1634
        %v1636 = vrot.slane %v1629, %v1635
        %v1638 = vunpack.c.l.s4 1966171168
        %v1639 = vunpack.c.0.s8 %v1638
        %v1640 = vlaneseq
        %v1641 = vshrl.u32 %v1640, 7
        %v1642 = vsub.s32 %v1639, %v1641
        %v1643 = vrot.slane %v1636, %v1642
        %v1645 = vlaneseq
        %vm1646 = vcmp.ge.s32.totalorder %v1645, 0
        %vm1647 = vcmp.lt.s32.totalorder %v1645, 192
        %vm1648 = vmand %vm1646, %vm1647
        %1649 = vst.msk [vmem:[%s204] sm:$0x3] %vm1648, %v1643
        %p1650 = scmp.lt.s32.totalorder %s16, 1
        %s1651 = scalar_select %p1650, %s16, 1
        %s1652 = smul.addr %s1651, 2
        %s1653 = scalar_lea.vmem %s4, %s1652
        // Predicated region
        $region41: #{_fused_forward.1} parent=35 // pred_check
          %p1654 = pneg %p123
        $region42: #{_fused_forward.1} parent=35 // pred_check_branch
          %1656 = sbr.rel (%p1654) target = $region44
        $region43: #{_fused_forward.1} parent=35 // pred_region
          _
        $region44: #{_fused_forward.1} parent=35 // pred_fallthru
          _
      $region36: #{_fused_forward.1} parent=5 // pred_fallthru
        _
      %p1657 = scmp.le.s32.totalorder 2, %s11
      // Predicated region
      $region45: #{_fused_forward.1} parent=5 // pred_check
        %p1658 = pneg %p1657
      $region46: #{_fused_forward.1} parent=5 // pred_check_branch
        %1660 = sbr.rel (%p1658) target = $region48
      $region47: #{_fused_forward.1} parent=5 // pred_region
        %s1661 = ssub.s32 %s11, 2
        // Predicated region
        $region49: #{_fused_forward.1} parent=47 // pred_check
          %p1662 = pneg %p129
        $region50: #{_fused_forward.1} parent=47 // pred_check_branch
          %1664 = sbr.rel (%p1662) target = $region52
        $region51: #{_fused_forward.1} parent=47 // pred_region
          %p1665 = scmp.lt.s32.totalorder %s17, 1
          %s1666 = scalar_select %p1665, %s17, 1
          %s1667 = smul.addr %s1666, 2
          %s1668 = scalar_lea.vmem %s4, %s1667
        $region52: #{_fused_forward.1} parent=47 // pred_fallthru
          _
      $region48: #{_fused_forward.1} parent=5 // pred_fallthru
        _
    $region6: #{_fused_forward.1} parent=1 // loop_footer
      %s15 = sadd.s32 1, %s11
    $region7: #{_fused_forward.1} parent=1 // loop_footer_branch
      %10 = sbr.rel target = $region3
    $region8: #{_fused_forward.1} parent=1 // loop_exit
      _
    %1669 = vsyncpa [#allocation3], 1
    %s1670 = scalar_lea.sflag [#allocation3], 1
    %1671 = vsyncpa %s1670, 1

</llo_original>
